<compile_context>
chip_gen: v5e
topology: v5e:2x2
jax: 0.10.0
libtpu: 0.0.40
codegen_flags: <defaults>
</compile_context>

<pallas_src>
import functools

import jax
import jax.numpy as jnp
from jax.experimental import pallas as pl
from jax.experimental.pallas import tpu as pltpu

_PAD_LABEL = jnp.iinfo(jnp.int32).min  # sentinel label for padded pixels


def _fold_lanes(x, width=128):
    """Sum 128-lane groups of a (tm, tn) tile -> (tm, 128). Tile-aligned static
    slices, pure VPU adds (no cross-lane reduction)."""
    tn = x.shape[1]
    acc = x[:, :width]
    for g in range(1, tn // width):
        acc = acc + x[:, g * width:(g + 1) * width]
    return acc


def _supcon_kernel(fr_ref, fc_ref, lr_ref, lc_ref, sp_ref, sa_ref,
                   sp_acc, sa_acc, *, inv_temp, ignore_background, pad_label):
    i = pl.program_id(0)          # row-tile index (parallel)
    j = pl.program_id(1)          # col-tile index (reduction axis)

    # Zero the lane-dense accumulators at the start of every row sweep.
    @pl.when(j == 0)
    def _():
        sp_acc[...] = jnp.zeros_like(sp_acc)
        sa_acc[...] = jnp.zeros_like(sa_acc)

    fr = fr_ref[...]              # (tm, C) f32, already L2 normalized
    fc = fc_ref[...]              # (tn, C) f32

    # sim = feats_row @ feats_col.T / temperature
    sim = jax.lax.dot_general(fr, fc, (((1,), (1,)), ((), ())),
                              preferred_element_type=jnp.float32) * inv_temp
    # Safe without max-subtraction: rows are L2-normalized so |sim| <= 1/T.
    exp_sim = jnp.exp(sim)        # (tm, tn)

    lr = lr_ref[...]              # (tm, 1) int32
    lc = lc_ref[...]              # (1, tn) int32

    # Columns dropped from both sums: padded pixels and (optionally) background.
    col_valid = lc != pad_label   # (1, tn)
    if ignore_background:
        col_valid = jnp.logical_and(col_valid, lc != 0)
    label_eq = lr == lc           # (tm, tn)

    e_all = jnp.where(col_valid, exp_sim, 0.0)   # denominator candidates
    e_pos = jnp.where(label_eq, e_all, 0.0)      # positive candidates

    # Off-diagonal tiles never touch the global diagonal (tm == tn), so skip the
    # iota/compare work there.
    @pl.when(i != j)
    def _():
        sa_acc[...] += _fold_lanes(e_all)
        sp_acc[...] += _fold_lanes(e_pos)

    @pl.when(i == j)
    def _():
        tm, tn = exp_sim.shape
        not_diag = (jax.lax.broadcasted_iota(jnp.int32, (tm, tn), 0)
                    != jax.lax.broadcasted_iota(jnp.int32, (tm, tn), 1))
        sa_acc[...] += _fold_lanes(jnp.where(not_diag, e_all, 0.0))
        sp_acc[...] += _fold_lanes(jnp.where(not_diag, e_pos, 0.0))

    # Single cross-lane reduction + narrow (tm, 1) store per row sweep.
    @pl.when(j == pl.num_programs(1) - 1)
    def _():
        sp_ref[...] = jnp.sum(sp_acc[...], axis=1, keepdims=True)
        sa_ref[...] = jnp.sum(sa_acc[...], axis=1, keepdims=True)


def pixelwise_supcon_loss(emb, targets, *, temperature=0.07,
                          ignore_background=False, max_samples=15000,
                          tile=512):
    """emb: (N, C, H, W) float; targets: (N, H, W) int.  Returns scalar f32."""
    n, c, h, w = emb.shape

    # (N, C, H, W) -> (N, H, W, C) -> (M, C), L2 normalize rows (F.normalize).
    feats = jnp.transpose(emb, (0, 2, 3, 1)).reshape(-1, c).astype(jnp.float32)
    norm = jnp.sqrt(jnp.sum(feats * feats, axis=1, keepdims=True))
    feats = feats / jnp.maximum(norm, 1e-12)
    labels = targets.reshape(-1).astype(jnp.int32)

    total = feats.shape[0]
    if total < 2:
        return jnp.float32(0.0)
    if max_samples and total > max_samples:
        # TODO(synk): torch.randperm subsampling (dynamic shapes + RNG mismatch) not replicated.
        pass
    # TODO(synk): with ignore_background a host-side compaction of valid pixels would
    # shrink the O(M^2) work; with static JAX shapes we mask background columns in-kernel.

    assert tile % 128 == 0, "tile must be a multiple of 128 (lane width)"
    # Shrink the tile for small problems and, when possible, keep >= 2 row tiles
    # so the 'parallel' row axis can shard across v7x's two TensorCores.
    m128 = ((total + 127) // 128) * 128
    tile = min(tile, m128)
    if m128 // tile < 2 and m128 >= 256:
        tile = max(128, (m128 // 2 // 128) * 128)
    tm = tn = tile                     # equal tiles -> only i == j tiles hit the diagonal

    # Pad M up to a multiple of the tile size; padded pixels get a sentinel
    # label and are masked out inside the kernel.
    m_pad = ((total + tile - 1) // tile) * tile
    pad = m_pad - total
    feats_p = jnp.pad(feats, ((0, pad), (0, 0)))
    labels_p = jnp.pad(labels, (0, pad), constant_values=_PAD_LABEL)
    labels_row = labels_p.reshape(m_pad, 1)
    labels_col = labels_p.reshape(1, m_pad)

    grid = (m_pad // tm, m_pad // tn)
    kernel = functools.partial(
        _supcon_kernel,
        inv_temp=1.0 / temperature,
        ignore_background=ignore_background, pad_label=_PAD_LABEL)

    sum_pos, sum_all = pl.pallas_call(
        kernel,
        out_shape=(jax.ShapeDtypeStruct((m_pad, 1), jnp.float32),
                   jax.ShapeDtypeStruct((m_pad, 1), jnp.float32)),
        grid_spec=pltpu.PrefetchScalarGridSpec(
            num_scalar_prefetch=0,
            grid=grid,
            in_specs=[
                pl.BlockSpec((tm, c), lambda i, j: (i, 0)),   # row features
                pl.BlockSpec((tn, c), lambda i, j: (j, 0)),   # col features
                pl.BlockSpec((tm, 1), lambda i, j: (i, 0)),   # row labels
                pl.BlockSpec((1, tn), lambda i, j: (0, j)),   # col labels
            ],
            out_specs=[
                pl.BlockSpec((tm, 1), lambda i, j: (i, 0)),   # sum_pos (written at last j)
                pl.BlockSpec((tm, 1), lambda i, j: (i, 0)),   # sum_all (written at last j)
            ],
            scratch_shapes=[
                pltpu.VMEM((tm, 128), jnp.float32),           # lane-dense sum_pos acc
                pltpu.VMEM((tm, 128), jnp.float32),           # lane-dense sum_all acc
            ],
        ),
        compiler_params=pltpu.CompilerParams(
            dimension_semantics=("parallel", "arbitrary")),
    )(feats_p, feats_p, labels_row, labels_col)

    sum_pos = sum_pos[:total, 0]
    sum_all = sum_all[:total, 0]

    valid = sum_pos > 0.0
    loss_terms = jnp.where(valid, -jnp.log(sum_pos / sum_all), 0.0)
    count = jnp.sum(valid).astype(jnp.float32)
    # .mean() over an empty selection in torch is NaN; 0/0 reproduces that.
    return jnp.sum(loss_terms) / count


def _reference_loss(emb, targets, *, temperature=0.07, ignore_background=False):
    """Pure-JAX reference mirroring the PyTorch forward (no subsampling)."""
    n, c, h, w = emb.shape
    feats = jnp.transpose(emb, (0, 2, 3, 1)).reshape(-1, c).astype(jnp.float32)
    feats = feats / jnp.maximum(
        jnp.sqrt(jnp.sum(feats * feats, axis=1, keepdims=True)), 1e-12)
    labels = targets.reshape(-1).astype(jnp.int32)
    if ignore_background:
        keep_col = labels != 0
    else:
        keep_col = jnp.ones_like(labels, dtype=bool)
    sim = feats @ feats.T / temperature
    exp_sim = jnp.exp(sim)
    label_eq = labels[None, :] == labels[:, None]
    eye = jnp.eye(labels.shape[0], dtype=bool)
    keep = (~eye) & keep_col[None, :]
    pos = label_eq & keep
    sum_pos = jnp.sum(jnp.where(pos, exp_sim, 0.0), axis=1)
    sum_all = jnp.sum(jnp.where(keep, exp_sim, 0.0), axis=1)
    valid = (sum_pos > 0) & keep_col
    terms = jnp.where(valid, -jnp.log(sum_pos / sum_all), 0.0)
    return jnp.sum(terms) / jnp.sum(valid).astype(jnp.float32)


if __name__ == "__main__":
    key = jax.random.PRNGKey(0)
    k_emb, k_tgt = jax.random.split(key)

    N, C, H, W = 2, 4, 16, 16                       # M = N*H*W = 512 pixels
    emb = jax.random.normal(k_emb, (N, C, H, W), dtype=jnp.float32)
    targets = jax.random.randint(k_tgt, (N, H, W), 0, 4, dtype=jnp.int32)

    loss = pixelwise_supcon_loss(emb, targets)
    loss = jax.block_until_ready(loss)

    ref = jax.block_until_ready(_reference_loss(emb, targets))
    assert jnp.isfinite(loss), f"non-finite loss: {loss}"
    assert jnp.allclose(loss, ref, rtol=1e-4, atol=1e-5), (loss, ref)

    # Also exercise the ignore_background path (diag + off-diag tiles, masking).
    loss_bg = jax.block_until_ready(
        pixelwise_supcon_loss(emb, targets, ignore_background=True))
    ref_bg = jax.block_until_ready(
        _reference_loss(emb, targets, ignore_background=True))
    assert jnp.isfinite(loss_bg), f"non-finite loss: {loss_bg}"
    assert jnp.allclose(loss_bg, ref_bg, rtol=1e-4, atol=1e-5), (loss_bg, ref_bg)

    print("KERNEL_OK")
</pallas_src>

<mosaic_0001>
module attributes {stable_mosaic.version = 11 : i64} {
  func.func @_supcon_kernel(%arg0: i32, %arg1: i32, %arg2: memref<256x4xf32, #tpu.memory_space<vmem>>, %arg3: memref<256x4xf32, #tpu.memory_space<vmem>>, %arg4: memref<256x1xi32, #tpu.memory_space<vmem>>, %arg5: memref<1x256xi32, #tpu.memory_space<vmem>>, %arg6: memref<256x1xf32, #tpu.memory_space<vmem>>, %arg7: memref<256x1xf32, #tpu.memory_space<vmem>>, %arg8: memref<256x128xf32, #tpu.memory_space<vmem>>, %arg9: memref<256x128xf32, #tpu.memory_space<vmem>>) attributes {dimension_semantics = [#tpu.dimension_semantics<parallel>, #tpu.dimension_semantics<arbitrary>], iteration_bounds = array<i64: 2, 2>, scalar_prefetch = 0 : i64, scratch_operands = 2 : i64, tpu.core_type = #tpu.core_type<tc>, window_params = [{transform_indices = @transform_0, window_bounds = array<i64: 256, 4>}, {transform_indices = @transform_1, window_bounds = array<i64: 256, 4>}, {transform_indices = @transform_2, window_bounds = array<i64: 256, 1>}, {transform_indices = @transform_3, window_bounds = array<i64: 1, 256>}, {transform_indices = @transform_4, window_bounds = array<i64: 256, 1>}, {transform_indices = @transform_5, window_bounds = array<i64: 256, 1>}]} {
    %c0_i32 = arith.constant 0 : i32
    %0 = arith.cmpi eq, %arg1, %c0_i32 : i32
    %1 = arith.extui %0 : i1 to i32
    %c0_i32_0 = arith.constant 0 : i32
    %2 = arith.cmpi ne, %1, %c0_i32_0 : i32
    scf.if %2 {
      %cst_14 = arith.constant 0.000000e+00 : f32
      %31 = vector.broadcast %cst_14 : f32 to vector<256x128xf32>
      %c0_15 = arith.constant 0 : index
      %c0_16 = arith.constant 0 : index
      %32 = vector.load %arg8[%c0_15, %c0_16] : memref<256x128xf32, #tpu.memory_space<vmem>>, vector<256x128xf32>
      tpu.vector_store %arg8[%c0_15, %c0_16], %31 {strides = array<i32>} : memref<256x128xf32, #tpu.memory_space<vmem>>, vector<256x128xf32>,
      %cst_17 = arith.constant 0.000000e+00 : f32
      %33 = vector.broadcast %cst_17 : f32 to vector<256x128xf32>
      %c0_18 = arith.constant 0 : index
      %c0_19 = arith.constant 0 : index
      %34 = vector.load %arg9[%c0_18, %c0_19] : memref<256x128xf32, #tpu.memory_space<vmem>>, vector<256x128xf32>
      tpu.vector_store %arg9[%c0_18, %c0_19], %33 {strides = array<i32>} : memref<256x128xf32, #tpu.memory_space<vmem>>, vector<256x128xf32>,
    } else {
    }
    %c0 = arith.constant 0 : index
    %c0_1 = arith.constant 0 : index
    %3 = vector.load %arg2[%c0, %c0_1] : memref<256x4xf32, #tpu.memory_space<vmem>>, vector<256x4xf32>
    %c0_2 = arith.constant 0 : index
    %c0_3 = arith.constant 0 : index
    %4 = vector.load %arg3[%c0_2, %c0_3] : memref<256x4xf32, #tpu.memory_space<vmem>>, vector<256x4xf32>
    %cst = arith.constant dense<0.000000e+00> : vector<256x256xf32>
    %5 = tpu.matmul %3, %4, %cst {dimension_numbers = #tpu.dot_dimension_numbers<[1], [1], [0], [0], [0, 0, 1, 0], [], []>} : vector<256x4xf32>, vector<256x4xf32>, vector<256x256xf32> -> vector<256x256xf32>
    %cst_4 = arith.constant 14.2857141 : f32
    %6 = vector.broadcast %cst_4 : f32 to vector<256x256xf32>
    %7 = arith.mulf %5, %6 : vector<256x256xf32>
    %8 = math.exp %7 : vector<256x256xf32>
    %c0_5 = arith.constant 0 : index
    %c0_6 = arith.constant 0 : index
    %9 = vector.load %arg4[%c0_5, %c0_6] : memref<256x1xi32, #tpu.memory_space<vmem>>, vector<256x1xi32>
    %c0_7 = arith.constant 0 : index
    %c0_8 = arith.constant 0 : index
    %10 = vector.load %arg5[%c0_7, %c0_8] : memref<1x256xi32, #tpu.memory_space<vmem>>, vector<1x256xi32>
    %c-2147483648_i32 = arith.constant -2147483648 : i32
    %11 = vector.broadcast %c-2147483648_i32 : i32 to vector<1x256xi32>
    %12 = arith.cmpi ne, %10, %11 : vector<1x256xi32>
    %13 = vector.broadcast %9 : vector<256x1xi32> to vector<256x256xi32>
    %14 = vector.broadcast %10 : vector<1x256xi32> to vector<256x256xi32>
    %15 = arith.cmpi eq, %13, %14 : vector<256x256xi32>
    %cst_9 = arith.constant 0.000000e+00 : f32
    %16 = vector.shape_cast %12 : vector<1x256xi1> to vector<1x256xi1>
    %17 = vector.broadcast %16 : vector<1x256xi1> to vector<256x256xi1>
    %18 = vector.broadcast %cst_9 : f32 to vector<256x256xf32>
    %19 = arith.select %17, %8, %18 : vector<256x256xi1>, vector<256x256xf32>
    %cst_10 = arith.constant 0.000000e+00 : f32
    %20 = vector.broadcast %cst_10 : f32 to vector<256x256xf32>
    %21 = arith.select %15, %19, %20 : vector<256x256xi1>, vector<256x256xf32>
    %22 = arith.cmpi ne, %arg0, %arg1 : i32
    %23 = arith.extui %22 : i1 to i32
    %c0_i32_11 = arith.constant 0 : i32
    %24 = arith.cmpi ne, %23, %c0_i32_11 : i32
    scf.if %24 {
      %c0_14 = arith.constant 0 : index
      %c0_15 = arith.constant 0 : index
      %31 = vector.load %arg9[%c0_14, %c0_15] : memref<256x128xf32, #tpu.memory_space<vmem>>, vector<256x128xf32>
      %32 = vector.extract_strided_slice %19 {offsets = [0, 0], sizes = [256, 128], strides = [1, 1]} : vector<256x256xf32> to vector<256x128xf32>
      %33 = vector.extract_strided_slice %19 {offsets = [0, 128], sizes = [256, 128], strides = [1, 1]} : vector<256x256xf32> to vector<256x128xf32>
      %34 = arith.addf %32, %33 : vector<256x128xf32>
      %35 = arith.addf %31, %34 : vector<256x128xf32>
      %c0_16 = arith.constant 0 : index
      %c0_17 = arith.constant 0 : index
      %36 = vector.load %arg9[%c0_16, %c0_17] : memref<256x128xf32, #tpu.memory_space<vmem>>, vector<256x128xf32>
      tpu.vector_store %arg9[%c0_16, %c0_17], %35 {strides = array<i32>} : memref<256x128xf32, #tpu.memory_space<vmem>>, vector<256x128xf32>,
      %c0_18 = arith.constant 0 : index
      %c0_19 = arith.constant 0 : index
      %37 = vector.load %arg8[%c0_18, %c0_19] : memref<256x128xf32, #tpu.memory_space<vmem>>, vector<256x128xf32>
      %38 = vector.extract_strided_slice %21 {offsets = [0, 0], sizes = [256, 128], strides = [1, 1]} : vector<256x256xf32> to vector<256x128xf32>
      %39 = vector.extract_strided_slice %21 {offsets = [0, 128], sizes = [256, 128], strides = [1, 1]} : vector<256x256xf32> to vector<256x128xf32>
      %40 = arith.addf %38, %39 : vector<256x128xf32>
      %41 = arith.addf %37, %40 : vector<256x128xf32>
      %c0_20 = arith.constant 0 : index
      %c0_21 = arith.constant 0 : index
      %42 = vector.load %arg8[%c0_20, %c0_21] : memref<256x128xf32, #tpu.memory_space<vmem>>, vector<256x128xf32>
      tpu.vector_store %arg8[%c0_20, %c0_21], %41 {strides = array<i32>} : memref<256x128xf32, #tpu.memory_space<vmem>>, vector<256x128xf32>,
    } else {
    }
    %25 = arith.cmpi eq, %arg0, %arg1 : i32
    %26 = arith.extui %25 : i1 to i32
    %c0_i32_12 = arith.constant 0 : i32
    %27 = arith.cmpi ne, %26, %c0_i32_12 : i32
    scf.if %27 {
      %31 = tpu.iota {dimensions = array<i32: 0>} : vector<256x256xi32>
      %32 = tpu.iota {dimensions = array<i32: 1>} : vector<256x256xi32>
      %33 = arith.cmpi ne, %31, %32 : vector<256x256xi32>
      %c0_14 = arith.constant 0 : index
      %c0_15 = arith.constant 0 : index
      %34 = vector.load %arg9[%c0_14, %c0_15] : memref<256x128xf32, #tpu.memory_space<vmem>>, vector<256x128xf32>
      %cst_16 = arith.constant 0.000000e+00 : f32
      %35 = vector.broadcast %cst_16 : f32 to vector<256x256xf32>
      %36 = arith.select %33, %19, %35 : vector<256x256xi1>, vector<256x256xf32>
      %37 = vector.extract_strided_slice %36 {offsets = [0, 0], sizes = [256, 128], strides = [1, 1]} : vector<256x256xf32> to vector<256x128xf32>
      %38 = vector.extract_strided_slice %36 {offsets = [0, 128], sizes = [256, 128], strides = [1, 1]} : vector<256x256xf32> to vector<256x128xf32>
      %39 = arith.addf %37, %38 : vector<256x128xf32>
      %40 = arith.addf %34, %39 : vector<256x128xf32>
      %c0_17 = arith.constant 0 : index
      %c0_18 = arith.constant 0 : index
      %41 = vector.load %arg9[%c0_17, %c0_18] : memref<256x128xf32, #tpu.memory_space<vmem>>, vector<256x128xf32>
      tpu.vector_store %arg9[%c0_17, %c0_18], %40 {strides = array<i32>} : memref<256x128xf32, #tpu.memory_space<vmem>>, vector<256x128xf32>,
      %c0_19 = arith.constant 0 : index
      %c0_20 = arith.constant 0 : index
      %42 = vector.load %arg8[%c0_19, %c0_20] : memref<256x128xf32, #tpu.memory_space<vmem>>, vector<256x128xf32>
      %cst_21 = arith.constant 0.000000e+00 : f32
      %43 = vector.broadcast %cst_21 : f32 to vector<256x256xf32>
      %44 = arith.select %33, %21, %43 : vector<256x256xi1>, vector<256x256xf32>
      %45 = vector.extract_strided_slice %44 {offsets = [0, 0], sizes = [256, 128], strides = [1, 1]} : vector<256x256xf32> to vector<256x128xf32>
      %46 = vector.extract_strided_slice %44 {offsets = [0, 128], sizes = [256, 128], strides = [1, 1]} : vector<256x256xf32> to vector<256x128xf32>
      %47 = arith.addf %45, %46 : vector<256x128xf32>
      %48 = arith.addf %42, %47 : vector<256x128xf32>
      %c0_22 = arith.constant 0 : index
      %c0_23 = arith.constant 0 : index
      %49 = vector.load %arg8[%c0_22, %c0_23] : memref<256x128xf32, #tpu.memory_space<vmem>>, vector<256x128xf32>
      tpu.vector_store %arg8[%c0_22, %c0_23], %48 {strides = array<i32>} : memref<256x128xf32, #tpu.memory_space<vmem>>, vector<256x128xf32>,
    } else {
    }
    %c1_i32 = arith.constant 1 : i32
    %28 = arith.cmpi eq, %arg1, %c1_i32 : i32
    %29 = arith.extui %28 : i1 to i32
    %c0_i32_13 = arith.constant 0 : i32
    %30 = arith.cmpi ne, %29, %c0_i32_13 : i32
    scf.if %30 {
      %c0_14 = arith.constant 0 : index
      %c0_15 = arith.constant 0 : index
      %31 = vector.load %arg8[%c0_14, %c0_15] : memref<256x128xf32, #tpu.memory_space<vmem>>, vector<256x128xf32>
      %cst_16 = arith.constant dense<0.000000e+00> : vector<256xf32>
      %32 = vector.multi_reduction <add>, %31, %cst_16 [1] : vector<256x128xf32> to vector<256xf32>
      %33 = vector.shape_cast %32 : vector<256xf32> to vector<256x1xf32>
      %c0_17 = arith.constant 0 : index
      %c0_18 = arith.constant 0 : index
      %34 = vector.load %arg6[%c0_17, %c0_18] : memref<256x1xf32, #tpu.memory_space<vmem>>, vector<256x1xf32>
      tpu.vector_store %arg6[%c0_17, %c0_18], %33 {strides = array<i32>} : memref<256x1xf32, #tpu.memory_space<vmem>>, vector<256x1xf32>,
      %c0_19 = arith.constant 0 : index
      %c0_20 = arith.constant 0 : index
      %35 = vector.load %arg9[%c0_19, %c0_20] : memref<256x128xf32, #tpu.memory_space<vmem>>, vector<256x128xf32>
      %cst_21 = arith.constant dense<0.000000e+00> : vector<256xf32>
      %36 = vector.multi_reduction <add>, %35, %cst_21 [1] : vector<256x128xf32> to vector<256xf32>
      %37 = vector.shape_cast %36 : vector<256xf32> to vector<256x1xf32>
      %c0_22 = arith.constant 0 : index
      %c0_23 = arith.constant 0 : index
      %38 = vector.load %arg7[%c0_22, %c0_23] : memref<256x1xf32, #tpu.memory_space<vmem>>, vector<256x1xf32>
      tpu.vector_store %arg7[%c0_22, %c0_23], %37 {strides = array<i32>} : memref<256x1xf32, #tpu.memory_space<vmem>>, vector<256x1xf32>,
    } else {
    }
    return
  }
  func.func @transform_0(%arg0: i32, %arg1: i32) -> (i32, i32) {
    %c0_i32 = arith.constant 0 : i32
    %c0_i32_0 = arith.constant 0 : i32
    return %arg0, %c0_i32 : i32, i32
  }
  func.func @transform_1(%arg0: i32, %arg1: i32) -> (i32, i32) {
    %c0_i32 = arith.constant 0 : i32
    %c0_i32_0 = arith.constant 0 : i32
    return %arg1, %c0_i32 : i32, i32
  }
  func.func @transform_2(%arg0: i32, %arg1: i32) -> (i32, i32) {
    %c0_i32 = arith.constant 0 : i32
    %c0_i32_0 = arith.constant 0 : i32
    return %arg0, %c0_i32 : i32, i32
  }
  func.func @transform_3(%arg0: i32, %arg1: i32) -> (i32, i32) {
    %c0_i32 = arith.constant 0 : i32
    %c0_i32_0 = arith.constant 0 : i32
    return %c0_i32, %arg1 : i32, i32
  }
  func.func @transform_4(%arg0: i32, %arg1: i32) -> (i32, i32) {
    %c0_i32 = arith.constant 0 : i32
    %c0_i32_0 = arith.constant 0 : i32
    return %arg0, %c0_i32 : i32, i32
  }
  func.func @transform_5(%arg0: i32, %arg1: i32) -> (i32, i32) {
    %c0_i32 = arith.constant 0 : i32
    %c0_i32_0 = arith.constant 0 : i32
    return %arg0, %c0_i32 : i32, i32
  }
}

</mosaic_0001>

<llo_original>
// kernel: tpu_custom_call.1
$region0: #{tpu_custom_call.1}
  #allocation0 [shape = 'u32[]', space=smem, size = 0x4, offset = 0x4, fixed_abs, tag = 'smem constant byte address 0x4 - core index']
  #allocation1 [shape = 'u32[72,128]{1,0:T(1,128)}', space=vmem, size = 0x9000, scoped, tag = 'internal scratch']
  #allocation2 [shape = 'f32[256,128]{1,0:T(8,128)}', space=vmem, size = 0x20000, scoped, tag = 'scratch operand']
  #allocation3 [shape = 'f32[256,128]{1,0:T(8,128)}', space=vmem, size = 0x20000, scoped, tag = 'scratch operand']
  %s0 = inlined_call_operand.vmem [shape: f32[512,4], index: 0, kind: input, shape index: {}]
  %s1 = inlined_call_operand.vmem [shape: f32[512,4], index: 1, kind: input, shape index: {}]
  %s2 = inlined_call_operand.vmem [shape: s32[512,1], index: 2, kind: input, shape index: {}]
  %s3 = inlined_call_operand.vmem [shape: s32[1,512], index: 3, kind: input, shape index: {}]
  %s4 = inlined_call_operand.vmem [shape: f32[512,1], index: 4, kind: output, shape index: {0}]
  %s5 = inlined_call_operand.vmem [shape: f32[512,1], index: 5, kind: output, shape index: {1}]
  %6 = xla_tuple %s4, %s5
  %s7 = sld [smem:[#allocation0]]
  $region73: #{tpu_custom_call.1} parent=0
    _
  %s9 = ssub.s32 1, %s7
  %s10 = scalar_select 0, %s9, %s7
  loop: start=0, step=1, limit=6
  $region2: #{tpu_custom_call.1} parent=0 // loop_pre_header
    _
  $region3: #{tpu_custom_call.1} parent=0 // loop_header
    %s12 = sphi 0, %s16
    %p13 = scmp.ge.s32.totalorder %s12, 6
    %s19 = sphi 0, %s31
    %s20 = sphi 0, %s27
    %s21 = sphi 0, %s19
    %s22 = sphi 0, %s20
    %s23 = sphi 0, %s21
    %s24 = sphi 0, %s22
    %s34 = sphi 0, %s36
    %s37 = sphi 0, %s34
    %s38 = sphi 0, %s37
    %s54 = sphi 0, %s38
    %s60 = sphi 0, %s62
    %s63 = sphi 0, %s60
    %s64 = sphi 0, %s63
    %s80 = sphi 0, %s64
    %s86 = sphi 0, %s88
    %s89 = sphi 0, %s86
    %s90 = sphi 0, %s89
    %s106 = sphi 0, %s90
    %s112 = sphi 0, %s114
    %s115 = sphi 0, %s112
    %s116 = sphi 0, %s115
    %s132 = sphi 0, %s116
    %s138 = sphi 0, %s140
    %s141 = sphi 0, %s138
    %s142 = sphi 0, %s141
    %s158 = sphi 0, %s142
    %s164 = sphi 0, %s166
    %s167 = sphi 0, %s164
    %s168 = sphi 0, %s167
    %s184 = sphi 0, %s168
  $region4: #{tpu_custom_call.1} parent=0 // loop_header_branch
    %15 = sbr.rel (%p13) target = $region8
  $region5: #{tpu_custom_call.1} parent=0 // loop_body
    %s17 = ssub.s32 %s12, 1
    %s18 = ssub.s32 %s12, 2
    %s25 = sadd.s32 1, %s20
    %p26 = scmp.ge.s32.totalorder %s25, 2
    %s27 = scalar_select %p26, 0, %s25
    %s28 = sadd.s32 1, %s19
    %s29 = scalar_select %p26, %s28, %s19
    %p30 = scmp.ge.s32.totalorder %s29, 2
    %s31 = scalar_select %p30, 0, %s29
    %s32 = ssub.s32 %s19, %s31
    %p33 = scmp.eq.s32.totalorder %s32, 0
    %s35 = sadd.s32 %s34, 1
    %s36 = scalar_select %p33, %s34, %s35
    %p39 = pneg %p33
    %p40 = scmp.eq.s32.totalorder %s12, 3
    %p41 = por %p39, %p40
    %p42 = scmp.ne.s32.totalorder %s34, %s37
    %p43 = scmp.eq.s32.totalorder %s12, 0
    %p44 = por %p42, %p43
    %p45 = scmp.ne.s32.totalorder %s34, %s37
    %p46 = scmp.eq.s32.totalorder %s17, 3
    %p47 = por %p45, %p46
    %p48 = scmp.ne.s32.totalorder %s37, %s38
    %p49 = scmp.eq.s32.totalorder %s17, 0
    %p50 = por %p48, %p49
    %p51 = scmp.ne.s32.totalorder %s37, %s38
    %p52 = scmp.eq.s32.totalorder %s18, 3
    %p53 = por %p51, %p52
    %p55 = scmp.ne.s32.totalorder %s38, %s54
    %p56 = scmp.eq.s32.totalorder %s18, 0
    %p57 = por %p55, %p56
    %s58 = ssub.s32 %s20, %s27
    %p59 = scmp.eq.s32.totalorder %s58, 0
    %s61 = sadd.s32 %s60, 1
    %s62 = scalar_select %p59, %s60, %s61
    %p65 = pneg %p59
    %p66 = scmp.eq.s32.totalorder %s12, 3
    %p67 = por %p65, %p66
    %p68 = scmp.ne.s32.totalorder %s60, %s63
    %p69 = scmp.eq.s32.totalorder %s12, 0
    %p70 = por %p68, %p69
    %p71 = scmp.ne.s32.totalorder %s60, %s63
    %p72 = scmp.eq.s32.totalorder %s17, 3
    %p73 = por %p71, %p72
    %p74 = scmp.ne.s32.totalorder %s63, %s64
    %p75 = scmp.eq.s32.totalorder %s17, 0
    %p76 = por %p74, %p75
    %p77 = scmp.ne.s32.totalorder %s63, %s64
    %p78 = scmp.eq.s32.totalorder %s18, 3
    %p79 = por %p77, %p78
    %p81 = scmp.ne.s32.totalorder %s64, %s80
    %p82 = scmp.eq.s32.totalorder %s18, 0
    %p83 = por %p81, %p82
    %s84 = ssub.s32 %s19, %s31
    %p85 = scmp.eq.s32.totalorder %s84, 0
    %s87 = sadd.s32 %s86, 1
    %s88 = scalar_select %p85, %s86, %s87
    %p91 = pneg %p85
    %p92 = scmp.eq.s32.totalorder %s12, 3
    %p93 = por %p91, %p92
    %p94 = scmp.ne.s32.totalorder %s86, %s89
    %p95 = scmp.eq.s32.totalorder %s12, 0
    %p96 = por %p94, %p95
    %p97 = scmp.ne.s32.totalorder %s86, %s89
    %p98 = scmp.eq.s32.totalorder %s17, 3
    %p99 = por %p97, %p98
    %p100 = scmp.ne.s32.totalorder %s89, %s90
    %p101 = scmp.eq.s32.totalorder %s17, 0
    %p102 = por %p100, %p101
    %p103 = scmp.ne.s32.totalorder %s89, %s90
    %p104 = scmp.eq.s32.totalorder %s18, 3
    %p105 = por %p103, %p104
    %p107 = scmp.ne.s32.totalorder %s90, %s106
    %p108 = scmp.eq.s32.totalorder %s18, 0
    %p109 = por %p107, %p108
    %s110 = ssub.s32 %s20, %s27
    %p111 = scmp.eq.s32.totalorder %s110, 0
    %s113 = sadd.s32 %s112, 1
    %s114 = scalar_select %p111, %s112, %s113
    %p117 = pneg %p111
    %p118 = scmp.eq.s32.totalorder %s12, 3
    %p119 = por %p117, %p118
    %p120 = scmp.ne.s32.totalorder %s112, %s115
    %p121 = scmp.eq.s32.totalorder %s12, 0
    %p122 = por %p120, %p121
    %p123 = scmp.ne.s32.totalorder %s112, %s115
    %p124 = scmp.eq.s32.totalorder %s17, 3
    %p125 = por %p123, %p124
    %p126 = scmp.ne.s32.totalorder %s115, %s116
    %p127 = scmp.eq.s32.totalorder %s17, 0
    %p128 = por %p126, %p127
    %p129 = scmp.ne.s32.totalorder %s115, %s116
    %p130 = scmp.eq.s32.totalorder %s18, 3
    %p131 = por %p129, %p130
    %p133 = scmp.ne.s32.totalorder %s116, %s132
    %p134 = scmp.eq.s32.totalorder %s18, 0
    %p135 = por %p133, %p134
    %s136 = ssub.s32 %s19, %s31
    %p137 = scmp.eq.s32.totalorder %s136, 0
    %s139 = sadd.s32 %s138, 1
    %s140 = scalar_select %p137, %s138, %s139
    %p143 = pneg %p137
    %p144 = scmp.eq.s32.totalorder %s12, 3
    %p145 = por %p143, %p144
    %p146 = scmp.ne.s32.totalorder %s138, %s141
    %p147 = scmp.eq.s32.totalorder %s12, 0
    %p148 = por %p146, %p147
    %p149 = scmp.ne.s32.totalorder %s138, %s141
    %p150 = scmp.eq.s32.totalorder %s17, 3
    %p151 = por %p149, %p150
    %p152 = scmp.ne.s32.totalorder %s141, %s142
    %p153 = scmp.eq.s32.totalorder %s17, 0
    %p154 = por %p152, %p153
    %p155 = scmp.ne.s32.totalorder %s141, %s142
    %p156 = scmp.eq.s32.totalorder %s18, 3
    %p157 = por %p155, %p156
    %p159 = scmp.ne.s32.totalorder %s142, %s158
    %p160 = scmp.eq.s32.totalorder %s18, 0
    %p161 = por %p159, %p160
    %s162 = ssub.s32 %s19, %s31
    %p163 = scmp.eq.s32.totalorder %s162, 0
    %s165 = sadd.s32 %s164, 1
    %s166 = scalar_select %p163, %s164, %s165
    %p169 = pneg %p163
    %p170 = scmp.eq.s32.totalorder %s12, 3
    %p171 = por %p169, %p170
    %p172 = scmp.ne.s32.totalorder %s164, %s167
    %p173 = scmp.eq.s32.totalorder %s12, 0
    %p174 = por %p172, %p173
    %p175 = scmp.ne.s32.totalorder %s164, %s167
    %p176 = scmp.eq.s32.totalorder %s17, 3
    %p177 = por %p175, %p176
    %p178 = scmp.ne.s32.totalorder %s167, %s168
    %p179 = scmp.eq.s32.totalorder %s17, 0
    %p180 = por %p178, %p179
    %p181 = scmp.ne.s32.totalorder %s167, %s168
    %p182 = scmp.eq.s32.totalorder %s18, 3
    %p183 = por %p181, %p182
    %p185 = scmp.ne.s32.totalorder %s168, %s184
    %p186 = scmp.eq.s32.totalorder %s18, 0
    %p187 = por %p185, %p186
    %p188 = scmp.le.s32.totalorder 1, %s12
    %p189 = scmp.lt.s32.totalorder %s12, 5
    %p190 = pnand %p188, %p189
    %p191 = pneg %p190
    // Predicated region
    $region9: #{tpu_custom_call.1} parent=5 // pred_check
      _
    $region10: #{tpu_custom_call.1} parent=5 // pred_check_branch
      %193 = sbr.rel (%p190) target = $region12
    $region11: #{tpu_custom_call.1} parent=5 // pred_region
      %s194 = ssub.s32 %s12, 1
    $region12: #{tpu_custom_call.1} parent=5 // pred_fallthru
      _
    %p195 = scmp.lt.s32.totalorder %s12, 4
    // Predicated region
    $region13: #{tpu_custom_call.1} parent=5 // pred_check
      %p196 = pneg %p195
    $region14: #{tpu_custom_call.1} parent=5 // pred_check_branch
      %198 = sbr.rel (%p196) target = $region16
    $region15: #{tpu_custom_call.1} parent=5 // pred_region
      // Predicated region
      $region17: #{tpu_custom_call.1} parent=15 // pred_check
        %p199 = pneg %p44
      $region18: #{tpu_custom_call.1} parent=15 // pred_check_branch
        %201 = sbr.rel (%p199) target = $region20
      $region19: #{tpu_custom_call.1} parent=15 // pred_region
        %s202 = smul.u32 32, %s19
        %p203 = scmp.lt.s32.totalorder %s202, 63
        %s204 = scalar_select %p203, %s202, 63
        %s205 = smul.addr %s204, 8
        %s206 = scalar_lea.vmem %s0, %s205
        %s207 = smul.u32 32, %s19
      $region20: #{tpu_custom_call.1} parent=15 // pred_fallthru
        _
      // Predicated region
      $region21: #{tpu_custom_call.1} parent=15 // pred_check
        %p208 = pneg %p70
      $region22: #{tpu_custom_call.1} parent=15 // pred_check_branch
        %210 = sbr.rel (%p208) target = $region24
      $region23: #{tpu_custom_call.1} parent=15 // pred_region
        %s211 = smul.u32 32, %s20
        %p212 = scmp.lt.s32.totalorder %s211, 63
        %s213 = scalar_select %p212, %s211, 63
        %s214 = smul.addr %s213, 8
        %s215 = scalar_lea.vmem %s1, %s214
        %s216 = smul.u32 32, %s20
      $region24: #{tpu_custom_call.1} parent=15 // pred_fallthru
        _
      // Predicated region
      $region25: #{tpu_custom_call.1} parent=15 // pred_check
        %p217 = pneg %p96
      $region26: #{tpu_custom_call.1} parent=15 // pred_check_branch
        %219 = sbr.rel (%p217) target = $region28
      $region27: #{tpu_custom_call.1} parent=15 // pred_region
        %s220 = smul.u32 32, %s19
        %p221 = scmp.lt.s32.totalorder %s220, 63
        %s222 = scalar_select %p221, %s220, 63
        %s223 = smul.addr %s222, 8
        %s224 = scalar_lea.vmem %s2, %s223
        %s225 = smul.u32 32, %s19
      $region28: #{tpu_custom_call.1} parent=15 // pred_fallthru
        _
      // Predicated region
      $region29: #{tpu_custom_call.1} parent=15 // pred_check
        %p226 = pneg %p122
      $region30: #{tpu_custom_call.1} parent=15 // pred_check_branch
        %228 = sbr.rel (%p226) target = $region32
      $region31: #{tpu_custom_call.1} parent=15 // pred_region
        %s229 = smul.u32 2, %s20
        %p230 = scmp.lt.s32.totalorder %s229, 3
        %s231 = scalar_select %p230, %s229, 3
        %s232 = scalar_lea.vmem %s3, %s231
        %s233 = smul.u32 2, %s20
      $region32: #{tpu_custom_call.1} parent=15 // pred_fallthru
        _
    $region16: #{tpu_custom_call.1} parent=5 // pred_fallthru
      _
    %p234 = scmp.le.s32.totalorder 1, %s12
    %p235 = scmp.lt.s32.totalorder %s12, 5
    %p236 = pnand %p234, %p235
    %p237 = pneg %p236
    // Predicated region
    $region33: #{tpu_custom_call.1} parent=5 // pred_check
      _
    $region34: #{tpu_custom_call.1} parent=5 // pred_check_branch
      %239 = sbr.rel (%p236) target = $region36
    $region35: #{tpu_custom_call.1} parent=5 // pred_region
      %s240 = ssub.s32 %s12, 1
      %s241 = smul.u32 32, %s21
      %p242 = scmp.lt.s32.totalorder %s241, 63
      %s243 = scalar_select %p242, %s241, 63
      %s244 = smul.addr %s243, 8
      %s245 = scalar_lea.vmem %s0, %s244
      %p246 = pneg %p50
      %p247 = pneg %p47
      %s248 = smul.u32 32, %s22
      %p249 = scmp.lt.s32.totalorder %s248, 63
      %s250 = scalar_select %p249, %s248, 63
      %s251 = smul.addr %s250, 8
      %s252 = scalar_lea.vmem %s1, %s251
      %p253 = pneg %p76
      %p254 = pneg %p73
      %s255 = smul.u32 32, %s21
      %p256 = scmp.lt.s32.totalorder %s255, 63
      %s257 = scalar_select %p256, %s255, 63
      %s258 = smul.addr %s257, 8
      %s259 = scalar_lea.vmem %s2, %s258
      %p260 = pneg %p102
      %p261 = pneg %p99
      %s262 = smul.u32 2, %s22
      %p263 = scmp.lt.s32.totalorder %s262, 3
      %s264 = scalar_select %p263, %s262, 3
      %s265 = scalar_lea.vmem %s3, %s264
      %p266 = pneg %p128
      %p267 = pneg %p125
      %p268 = pneg %p154
      %p269 = pneg %p151
      %s270 = smul.u32 32, %s21
      %p271 = scmp.lt.s32.totalorder %s270, 63
      %s272 = scalar_select %p271, %s270, 63
      %s273 = smul.addr %s272, 8
      %s274 = scalar_lea.vmem %s4, %s273
      %p275 = pneg %p180
      %p276 = pneg %p177
      %s277 = smul.u32 32, %s21
      %p278 = scmp.lt.s32.totalorder %s277, 63
      %s279 = scalar_select %p278, %s277, 63
      %s280 = smul.addr %s279, 8
      %s281 = scalar_lea.vmem %s5, %s280
      %s282 = smul.u32 32, %s21
      %p283 = scmp.lt.s32.totalorder %s282, 63
      %s284 = scalar_select %p283, %s282, 63
      %s285 = smul.addr %s284, 8
      %s286 = scalar_lea.vmem %s0, %s285
      %s287 = smul.u32 32, %s21
      %s288 = smul.u32 32, %s22
      %p289 = scmp.lt.s32.totalorder %s288, 63
      %s290 = scalar_select %p289, %s288, 63
      %s291 = smul.addr %s290, 8
      %s292 = scalar_lea.vmem %s1, %s291
      %s293 = smul.u32 32, %s22
      %s294 = smul.u32 32, %s21
      %p295 = scmp.lt.s32.totalorder %s294, 63
      %s296 = scalar_select %p295, %s294, 63
      %s297 = smul.addr %s296, 8
      %s298 = scalar_lea.vmem %s2, %s297
      %s299 = smul.u32 32, %s21
      %s300 = smul.u32 2, %s22
      %p301 = scmp.lt.s32.totalorder %s300, 3
      %s302 = scalar_select %p301, %s300, 3
      %s303 = scalar_lea.vmem %s3, %s302
      %s304 = smul.u32 2, %s22
      %s305 = smul.u32 32, %s21
      %p306 = scmp.lt.s32.totalorder %s305, 63
      %s307 = scalar_select %p306, %s305, 63
      %s308 = smul.addr %s307, 8
      %s309 = scalar_lea.vmem %s4, %s308
      %s310 = smul.u32 32, %s21
      %s311 = smul.u32 32, %s21
      %p312 = scmp.lt.s32.totalorder %s311, 63
      %s313 = scalar_select %p312, %s311, 63
      %s314 = smul.addr %s313, 8
      %s315 = scalar_lea.vmem %s5, %s314
      %s316 = smul.u32 32, %s21
      %p317 = scmp.eq.s32.totalorder %s22, 0
      // Predicated region
      $region37: #{tpu_custom_call.1} parent=35 // pred_check
        %p318 = pneg %p317
      $region38: #{tpu_custom_call.1} parent=35 // pred_check_branch
        %320 = sbr.rel (%p318) target = $region40
      $region39: #{tpu_custom_call.1} parent=35 // pred_region
        %321 = vst [vmem:[#allocation2] sm:$0xff] 0.0
        %322 = vst [vmem:[#allocation2 + $0x8] sm:$0xff] 0.0
        %323 = vst [vmem:[#allocation2 + $0x10] sm:$0xff] 0.0
        %324 = vst [vmem:[#allocation2 + $0x18] sm:$0xff] 0.0
        %325 = vst [vmem:[#allocation2 + $0x20] sm:$0xff] 0.0
        %326 = vst [vmem:[#allocation2 + $0x28] sm:$0xff] 0.0
        %327 = vst [vmem:[#allocation2 + $0x30] sm:$0xff] 0.0
        %328 = vst [vmem:[#allocation2 + $0x38] sm:$0xff] 0.0
        %329 = vst [vmem:[#allocation2 + $0x40] sm:$0xff] 0.0
        %330 = vst [vmem:[#allocation2 + $0x48] sm:$0xff] 0.0
        %331 = vst [vmem:[#allocation2 + $0x50] sm:$0xff] 0.0
        %332 = vst [vmem:[#allocation2 + $0x58] sm:$0xff] 0.0
        %333 = vst [vmem:[#allocation2 + $0x60] sm:$0xff] 0.0
        %334 = vst [vmem:[#allocation2 + $0x68] sm:$0xff] 0.0
        %335 = vst [vmem:[#allocation2 + $0x70] sm:$0xff] 0.0
        %336 = vst [vmem:[#allocation2 + $0x78] sm:$0xff] 0.0
        %337 = vst [vmem:[#allocation2 + $0x80] sm:$0xff] 0.0
        %338 = vst [vmem:[#allocation2 + $0x88] sm:$0xff] 0.0
        %339 = vst [vmem:[#allocation2 + $0x90] sm:$0xff] 0.0
        %340 = vst [vmem:[#allocation2 + $0x98] sm:$0xff] 0.0
        %341 = vst [vmem:[#allocation2 + $0xa0] sm:$0xff] 0.0
        %342 = vst [vmem:[#allocation2 + $0xa8] sm:$0xff] 0.0
        %343 = vst [vmem:[#allocation2 + $0xb0] sm:$0xff] 0.0
        %344 = vst [vmem:[#allocation2 + $0xb8] sm:$0xff] 0.0
        %345 = vst [vmem:[#allocation2 + $0xc0] sm:$0xff] 0.0
        %346 = vst [vmem:[#allocation2 + $0xc8] sm:$0xff] 0.0
        %347 = vst [vmem:[#allocation2 + $0xd0] sm:$0xff] 0.0
        %348 = vst [vmem:[#allocation2 + $0xd8] sm:$0xff] 0.0
        %349 = vst [vmem:[#allocation2 + $0xe0] sm:$0xff] 0.0
        %350 = vst [vmem:[#allocation2 + $0xe8] sm:$0xff] 0.0
        %351 = vst [vmem:[#allocation2 + $0xf0] sm:$0xff] 0.0
        %352 = vst [vmem:[#allocation2 + $0xf8] sm:$0xff] 0.0
        %353 = vst [vmem:[#allocation3] sm:$0xff] 0.0
        %354 = vst [vmem:[#allocation3 + $0x8] sm:$0xff] 0.0
        %355 = vst [vmem:[#allocation3 + $0x10] sm:$0xff] 0.0
        %356 = vst [vmem:[#allocation3 + $0x18] sm:$0xff] 0.0
        %357 = vst [vmem:[#allocation3 + $0x20] sm:$0xff] 0.0
        %358 = vst [vmem:[#allocation3 + $0x28] sm:$0xff] 0.0
        %359 = vst [vmem:[#allocation3 + $0x30] sm:$0xff] 0.0
        %360 = vst [vmem:[#allocation3 + $0x38] sm:$0xff] 0.0
        %361 = vst [vmem:[#allocation3 + $0x40] sm:$0xff] 0.0
        %362 = vst [vmem:[#allocation3 + $0x48] sm:$0xff] 0.0
        %363 = vst [vmem:[#allocation3 + $0x50] sm:$0xff] 0.0
        %364 = vst [vmem:[#allocation3 + $0x58] sm:$0xff] 0.0
        %365 = vst [vmem:[#allocation3 + $0x60] sm:$0xff] 0.0
        %366 = vst [vmem:[#allocation3 + $0x68] sm:$0xff] 0.0
        %367 = vst [vmem:[#allocation3 + $0x70] sm:$0xff] 0.0
        %368 = vst [vmem:[#allocation3 + $0x78] sm:$0xff] 0.0
        %369 = vst [vmem:[#allocation3 + $0x80] sm:$0xff] 0.0
        %370 = vst [vmem:[#allocation3 + $0x88] sm:$0xff] 0.0
        %371 = vst [vmem:[#allocation3 + $0x90] sm:$0xff] 0.0
        %372 = vst [vmem:[#allocation3 + $0x98] sm:$0xff] 0.0
        %373 = vst [vmem:[#allocation3 + $0xa0] sm:$0xff] 0.0
        %374 = vst [vmem:[#allocation3 + $0xa8] sm:$0xff] 0.0
        %375 = vst [vmem:[#allocation3 + $0xb0] sm:$0xff] 0.0
        %376 = vst [vmem:[#allocation3 + $0xb8] sm:$0xff] 0.0
        %377 = vst [vmem:[#allocation3 + $0xc0] sm:$0xff] 0.0
        %378 = vst [vmem:[#allocation3 + $0xc8] sm:$0xff] 0.0
        %379 = vst [vmem:[#allocation3 + $0xd0] sm:$0xff] 0.0
        %380 = vst [vmem:[#allocation3 + $0xd8] sm:$0xff] 0.0
        %381 = vst [vmem:[#allocation3 + $0xe0] sm:$0xff] 0.0
        %382 = vst [vmem:[#allocation3 + $0xe8] sm:$0xff] 0.0
        %383 = vst [vmem:[#allocation3 + $0xf0] sm:$0xff] 0.0
        %384 = vst [vmem:[#allocation3 + $0xf8] sm:$0xff] 0.0
      $region40: #{tpu_custom_call.1} parent=35 // pred_fallthru
        _
      %v385 = vld [vmem:[%s286] sm:$0xff]
      %v386 = vld [vmem:[%s286 + $0x8] sm:$0xff]
      %v387 = vld [vmem:[%s286 + $0x10] sm:$0xff]
      %v388 = vld [vmem:[%s286 + $0x18] sm:$0xff]
      %v389 = vld [vmem:[%s286 + $0x20] sm:$0xff]
      %v390 = vld [vmem:[%s286 + $0x28] sm:$0xff]
      %v391 = vld [vmem:[%s286 + $0x30] sm:$0xff]
      %v392 = vld [vmem:[%s286 + $0x38] sm:$0xff]
      %v393 = vld [vmem:[%s286 + $0x40] sm:$0xff]
      %v394 = vld [vmem:[%s286 + $0x48] sm:$0xff]
      %v395 = vld [vmem:[%s286 + $0x50] sm:$0xff]
      %v396 = vld [vmem:[%s286 + $0x58] sm:$0xff]
      %v397 = vld [vmem:[%s286 + $0x60] sm:$0xff]
      %v398 = vld [vmem:[%s286 + $0x68] sm:$0xff]
      %v399 = vld [vmem:[%s286 + $0x70] sm:$0xff]
      %v400 = vld [vmem:[%s286 + $0x78] sm:$0xff]
      %v401 = vld [vmem:[%s286 + $0x80] sm:$0xff]
      %v402 = vld [vmem:[%s286 + $0x88] sm:$0xff]
      %v403 = vld [vmem:[%s286 + $0x90] sm:$0xff]
      %v404 = vld [vmem:[%s286 + $0x98] sm:$0xff]
      %v405 = vld [vmem:[%s286 + $0xa0] sm:$0xff]
      %v406 = vld [vmem:[%s286 + $0xa8] sm:$0xff]
      %v407 = vld [vmem:[%s286 + $0xb0] sm:$0xff]
      %v408 = vld [vmem:[%s286 + $0xb8] sm:$0xff]
      %v409 = vld [vmem:[%s286 + $0xc0] sm:$0xff]
      %v410 = vld [vmem:[%s286 + $0xc8] sm:$0xff]
      %v411 = vld [vmem:[%s286 + $0xd0] sm:$0xff]
      %v412 = vld [vmem:[%s286 + $0xd8] sm:$0xff]
      %v413 = vld [vmem:[%s286 + $0xe0] sm:$0xff]
      %v414 = vld [vmem:[%s286 + $0xe8] sm:$0xff]
      %v415 = vld [vmem:[%s286 + $0xf0] sm:$0xff]
      %v416 = vld [vmem:[%s286 + $0xf8] sm:$0xff]
      %v417 = vld [vmem:[%s292] sm:$0xff]
      %v418 = vld [vmem:[%s292 + $0x8] sm:$0xff]
      %v419 = vld [vmem:[%s292 + $0x10] sm:$0xff]
      %v420 = vld [vmem:[%s292 + $0x18] sm:$0xff]
      %v421 = vld [vmem:[%s292 + $0x20] sm:$0xff]
      %v422 = vld [vmem:[%s292 + $0x28] sm:$0xff]
      %v423 = vld [vmem:[%s292 + $0x30] sm:$0xff]
      %v424 = vld [vmem:[%s292 + $0x38] sm:$0xff]
      %v425 = vld [vmem:[%s292 + $0x40] sm:$0xff]
      %v426 = vld [vmem:[%s292 + $0x48] sm:$0xff]
      %v427 = vld [vmem:[%s292 + $0x50] sm:$0xff]
      %v428 = vld [vmem:[%s292 + $0x58] sm:$0xff]
      %v429 = vld [vmem:[%s292 + $0x60] sm:$0xff]
      %v430 = vld [vmem:[%s292 + $0x68] sm:$0xff]
      %v431 = vld [vmem:[%s292 + $0x70] sm:$0xff]
      %v432 = vld [vmem:[%s292 + $0x78] sm:$0xff]
      %v433 = vld [vmem:[%s292 + $0x80] sm:$0xff]
      %v434 = vld [vmem:[%s292 + $0x88] sm:$0xff]
      %v435 = vld [vmem:[%s292 + $0x90] sm:$0xff]
      %v436 = vld [vmem:[%s292 + $0x98] sm:$0xff]
      %v437 = vld [vmem:[%s292 + $0xa0] sm:$0xff]
      %v438 = vld [vmem:[%s292 + $0xa8] sm:$0xff]
      %v439 = vld [vmem:[%s292 + $0xb0] sm:$0xff]
      %v440 = vld [vmem:[%s292 + $0xb8] sm:$0xff]
      %v441 = vld [vmem:[%s292 + $0xc0] sm:$0xff]
      %v442 = vld [vmem:[%s292 + $0xc8] sm:$0xff]
      %v443 = vld [vmem:[%s292 + $0xd0] sm:$0xff]
      %v444 = vld [vmem:[%s292 + $0xd8] sm:$0xff]
      %v445 = vld [vmem:[%s292 + $0xe0] sm:$0xff]
      %v446 = vld [vmem:[%s292 + $0xe8] sm:$0xff]
      %v447 = vld [vmem:[%s292 + $0xf0] sm:$0xff]
      %v448 = vld [vmem:[%s292 + $0xf8] sm:$0xff]
      %vm449 = vcmask 31744
      %v451 = vsel %vm449, %v385, 0
      %v454 = vsel %vm449, %v386, 0
      %v457 = vsel %vm449, %v387, 0
      %v460 = vsel %vm449, %v388, 0
      %v463 = vsel %vm449, %v389, 0
      %v466 = vsel %vm449, %v390, 0
      %v469 = vsel %vm449, %v391, 0
      %v472 = vsel %vm449, %v392, 0
      %v475 = vsel %vm449, %v393, 0
      %v478 = vsel %vm449, %v394, 0
      %v481 = vsel %vm449, %v395, 0
      %v484 = vsel %vm449, %v396, 0
      %v487 = vsel %vm449, %v397, 0
      %v490 = vsel %vm449, %v398, 0
      %v493 = vsel %vm449, %v399, 0
      %v496 = vsel %vm449, %v400, 0
      %v499 = vsel %vm449, %v401, 0
      %v502 = vsel %vm449, %v402, 0
      %v505 = vsel %vm449, %v403, 0
      %v508 = vsel %vm449, %v404, 0
      %v511 = vsel %vm449, %v405, 0
      %v514 = vsel %vm449, %v406, 0
      %v517 = vsel %vm449, %v407, 0
      %v520 = vsel %vm449, %v408, 0
      %v523 = vsel %vm449, %v409, 0
      %v526 = vsel %vm449, %v410, 0
      %v529 = vsel %vm449, %v411, 0
      %v532 = vsel %vm449, %v412, 0
      %v535 = vsel %vm449, %v413, 0
      %v538 = vsel %vm449, %v414, 0
      %v541 = vsel %vm449, %v415, 0
      %v544 = vsel %vm449, %v416, 0
      %v547 = vsel %vm449, %v417, 0
      %v550 = vsel %vm449, %v418, 0
      %v553 = vsel %vm449, %v419, 0
      %v556 = vsel %vm449, %v420, 0
      %v559 = vsel %vm449, %v421, 0
      %v562 = vsel %vm449, %v422, 0
      %v565 = vsel %vm449, %v423, 0
      %v568 = vsel %vm449, %v424, 0
      %v571 = vsel %vm449, %v425, 0
      %v574 = vsel %vm449, %v426, 0
      %v577 = vsel %vm449, %v427, 0
      %v580 = vsel %vm449, %v428, 0
      %v583 = vsel %vm449, %v429, 0
      %v586 = vsel %vm449, %v430, 0
      %v589 = vsel %vm449, %v431, 0
      %v592 = vsel %vm449, %v432, 0
      %v595 = vsel %vm449, %v433, 0
      %v598 = vsel %vm449, %v434, 0
      %v601 = vsel %vm449, %v435, 0
      %v604 = vsel %vm449, %v436, 0
      %v607 = vsel %vm449, %v437, 0
      %v610 = vsel %vm449, %v438, 0
      %v613 = vsel %vm449, %v439, 0
      %v616 = vsel %vm449, %v440, 0
      %v619 = vsel %vm449, %v441, 0
      %v622 = vsel %vm449, %v442, 0
      %v625 = vsel %vm449, %v443, 0
      %v628 = vsel %vm449, %v444, 0
      %v631 = vsel %vm449, %v445, 0
      %v634 = vsel %vm449, %v446, 0
      %v637 = vsel %vm449, %v447, 0
      %v640 = vsel %vm449, %v448, 0
      %642 = vmatpush.xpose.msra.mxu0 %v592
      %643 = vmatpush.xpose.msra.mxu0 %v589
      %644 = vmatpush.xpose.msra.mxu0 %v586
      %645 = vmatpush.xpose.msra.mxu0 %v583
      %646 = vmatpush.xpose.msra.mxu0 %v580
      %647 = vmatpush.xpose.msra.mxu0 %v577
      %648 = vmatpush.xpose.msra.mxu0 %v574
      %649 = vmatpush.xpose.msra.mxu0 %v571
      %650 = vmatpush.xpose.msra.mxu0 %v568
      %651 = vmatpush.xpose.msra.mxu0 %v565
      %652 = vmatpush.xpose.msra.mxu0 %v562
      %653 = vmatpush.xpose.msra.mxu0 %v559
      %654 = vmatpush.xpose.msra.mxu0 %v556
      %655 = vmatpush.xpose.msra.mxu0 %v553
      %656 = vmatpush.xpose.msra.mxu0 %v550
      %657 = vmatpush.xpose.msra.mxu0 %v547
      %658 = vmatmul.f32.gmra.mxu0 %v451
      %v659 = vpop.f32.mrf.mxu0
      %v660 = vadd.f32 0.0, %v659
      %661 = vmatmul.f32.gmra.mxu0 %v454
      %v662 = vpop.f32.mrf.mxu0
      %v663 = vadd.f32 0.0, %v662
      %664 = vmatmul.f32.gmra.mxu0 %v457
      %v665 = vpop.f32.mrf.mxu0
      %v666 = vadd.f32 0.0, %v665
      %667 = vmatmul.f32.gmra.mxu0 %v460
      %v668 = vpop.f32.mrf.mxu0
      %v669 = vadd.f32 0.0, %v668
      %670 = vmatmul.f32.gmra.mxu0 %v463
      %v671 = vpop.f32.mrf.mxu0
      %v672 = vadd.f32 0.0, %v671
      %673 = vmatmul.f32.gmra.mxu0 %v466
      %v674 = vpop.f32.mrf.mxu0
      %v675 = vadd.f32 0.0, %v674
      %676 = vmatmul.f32.gmra.mxu0 %v469
      %v677 = vpop.f32.mrf.mxu0
      %v678 = vadd.f32 0.0, %v677
      %679 = vmatmul.f32.gmra.mxu0 %v472
      %v680 = vpop.f32.mrf.mxu0
      %v681 = vadd.f32 0.0, %v680
      %682 = vmatmul.f32.gmra.mxu0 %v475
      %v683 = vpop.f32.mrf.mxu0
      %v684 = vadd.f32 0.0, %v683
      %685 = vmatmul.f32.gmra.mxu0 %v478
      %v686 = vpop.f32.mrf.mxu0
      %v687 = vadd.f32 0.0, %v686
      %688 = vmatmul.f32.gmra.mxu0 %v481
      %v689 = vpop.f32.mrf.mxu0
      %v690 = vadd.f32 0.0, %v689
      %691 = vmatmul.f32.gmra.mxu0 %v484
      %v692 = vpop.f32.mrf.mxu0
      %v693 = vadd.f32 0.0, %v692
      %694 = vmatmul.f32.gmra.mxu0 %v487
      %v695 = vpop.f32.mrf.mxu0
      %v696 = vadd.f32 0.0, %v695
      %697 = vmatmul.f32.gmra.mxu0 %v490
      %v698 = vpop.f32.mrf.mxu0
      %v699 = vadd.f32 0.0, %v698
      %700 = vmatmul.f32.gmra.mxu0 %v493
      %v701 = vpop.f32.mrf.mxu0
      %v702 = vadd.f32 0.0, %v701
      %703 = vmatmul.f32.gmra.mxu0 %v496
      %v704 = vpop.f32.mrf.mxu0
      %v705 = vadd.f32 0.0, %v704
      %706 = vmatmul.f32.gmra.mxu0 %v499
      %v707 = vpop.f32.mrf.mxu0
      %v708 = vadd.f32 0.0, %v707
      %709 = vmatmul.f32.gmra.mxu0 %v502
      %v710 = vpop.f32.mrf.mxu0
      %v711 = vadd.f32 0.0, %v710
      %712 = vmatmul.f32.gmra.mxu0 %v505
      %v713 = vpop.f32.mrf.mxu0
      %v714 = vadd.f32 0.0, %v713
      %715 = vmatmul.f32.gmra.mxu0 %v508
      %v716 = vpop.f32.mrf.mxu0
      %v717 = vadd.f32 0.0, %v716
      %718 = vmatmul.f32.gmra.mxu0 %v511
      %v719 = vpop.f32.mrf.mxu0
      %v720 = vadd.f32 0.0, %v719
      %721 = vmatmul.f32.gmra.mxu0 %v514
      %v722 = vpop.f32.mrf.mxu0
      %v723 = vadd.f32 0.0, %v722
      %724 = vmatmul.f32.gmra.mxu0 %v517
      %v725 = vpop.f32.mrf.mxu0
      %v726 = vadd.f32 0.0, %v725
      %727 = vmatmul.f32.gmra.mxu0 %v520
      %v728 = vpop.f32.mrf.mxu0
      %v729 = vadd.f32 0.0, %v728
      %730 = vmatmul.f32.gmra.mxu0 %v523
      %v731 = vpop.f32.mrf.mxu0
      %v732 = vadd.f32 0.0, %v731
      %733 = vmatmul.f32.gmra.mxu0 %v526
      %v734 = vpop.f32.mrf.mxu0
      %v735 = vadd.f32 0.0, %v734
      %736 = vmatmul.f32.gmra.mxu0 %v529
      %v737 = vpop.f32.mrf.mxu0
      %v738 = vadd.f32 0.0, %v737
      %739 = vmatmul.f32.gmra.mxu0 %v532
      %v740 = vpop.f32.mrf.mxu0
      %v741 = vadd.f32 0.0, %v740
      %742 = vmatmul.f32.gmra.mxu0 %v535
      %v743 = vpop.f32.mrf.mxu0
      %v744 = vadd.f32 0.0, %v743
      %745 = vmatmul.f32.gmra.mxu0 %v538
      %v746 = vpop.f32.mrf.mxu0
      %v747 = vadd.f32 0.0, %v746
      %748 = vmatmul.f32.gmra.mxu0 %v541
      %v749 = vpop.f32.mrf.mxu0
      %v750 = vadd.f32 0.0, %v749
      %751 = vmatmul.f32.gmra.mxu0 %v544
      %v752 = vpop.f32.mrf.mxu0
      %v753 = vadd.f32 0.0, %v752
      %754 = vdwg.mxu0
      %755 = vmatpush.xpose.msra.mxu0 %v640
      %756 = vmatpush.xpose.msra.mxu0 %v637
      %757 = vmatpush.xpose.msra.mxu0 %v634
      %758 = vmatpush.xpose.msra.mxu0 %v631
      %759 = vmatpush.xpose.msra.mxu0 %v628
      %760 = vmatpush.xpose.msra.mxu0 %v625
      %761 = vmatpush.xpose.msra.mxu0 %v622
      %762 = vmatpush.xpose.msra.mxu0 %v619
      %763 = vmatpush.xpose.msra.mxu0 %v616
      %764 = vmatpush.xpose.msra.mxu0 %v613
      %765 = vmatpush.xpose.msra.mxu0 %v610
      %766 = vmatpush.xpose.msra.mxu0 %v607
      %767 = vmatpush.xpose.msra.mxu0 %v604
      %768 = vmatpush.xpose.msra.mxu0 %v601
      %769 = vmatpush.xpose.msra.mxu0 %v598
      %770 = vmatpush.xpose.msra.mxu0 %v595
      %771 = vmatmul.f32.gmra.mxu0 %v451
      %v772 = vpop.f32.mrf.mxu0
      %v773 = vadd.f32 0.0, %v772
      %774 = vmatmul.f32.gmra.mxu0 %v454
      %v775 = vpop.f32.mrf.mxu0
      %v776 = vadd.f32 0.0, %v775
      %777 = vmatmul.f32.gmra.mxu0 %v457
      %v778 = vpop.f32.mrf.mxu0
      %v779 = vadd.f32 0.0, %v778
      %780 = vmatmul.f32.gmra.mxu0 %v460
      %v781 = vpop.f32.mrf.mxu0
      %v782 = vadd.f32 0.0, %v781
      %783 = vmatmul.f32.gmra.mxu0 %v463
      %v784 = vpop.f32.mrf.mxu0
      %v785 = vadd.f32 0.0, %v784
      %786 = vmatmul.f32.gmra.mxu0 %v466
      %v787 = vpop.f32.mrf.mxu0
      %v788 = vadd.f32 0.0, %v787
      %789 = vmatmul.f32.gmra.mxu0 %v469
      %v790 = vpop.f32.mrf.mxu0
      %v791 = vadd.f32 0.0, %v790
      %792 = vmatmul.f32.gmra.mxu0 %v472
      %v793 = vpop.f32.mrf.mxu0
      %v794 = vadd.f32 0.0, %v793
      %795 = vmatmul.f32.gmra.mxu0 %v475
      %v796 = vpop.f32.mrf.mxu0
      %v797 = vadd.f32 0.0, %v796
      %798 = vmatmul.f32.gmra.mxu0 %v478
      %v799 = vpop.f32.mrf.mxu0
      %v800 = vadd.f32 0.0, %v799
      %801 = vmatmul.f32.gmra.mxu0 %v481
      %v802 = vpop.f32.mrf.mxu0
      %v803 = vadd.f32 0.0, %v802
      %804 = vmatmul.f32.gmra.mxu0 %v484
      %v805 = vpop.f32.mrf.mxu0
      %v806 = vadd.f32 0.0, %v805
      %807 = vmatmul.f32.gmra.mxu0 %v487
      %v808 = vpop.f32.mrf.mxu0
      %v809 = vadd.f32 0.0, %v808
      %810 = vmatmul.f32.gmra.mxu0 %v490
      %v811 = vpop.f32.mrf.mxu0
      %v812 = vadd.f32 0.0, %v811
      %813 = vmatmul.f32.gmra.mxu0 %v493
      %v814 = vpop.f32.mrf.mxu0
      %v815 = vadd.f32 0.0, %v814
      %816 = vmatmul.f32.gmra.mxu0 %v496
      %v817 = vpop.f32.mrf.mxu0
      %v818 = vadd.f32 0.0, %v817
      %819 = vmatmul.f32.gmra.mxu0 %v499
      %v820 = vpop.f32.mrf.mxu0
      %v821 = vadd.f32 0.0, %v820
      %822 = vmatmul.f32.gmra.mxu0 %v502
      %v823 = vpop.f32.mrf.mxu0
      %v824 = vadd.f32 0.0, %v823
      %825 = vmatmul.f32.gmra.mxu0 %v505
      %v826 = vpop.f32.mrf.mxu0
      %v827 = vadd.f32 0.0, %v826
      %828 = vmatmul.f32.gmra.mxu0 %v508
      %v829 = vpop.f32.mrf.mxu0
      %v830 = vadd.f32 0.0, %v829
      %831 = vmatmul.f32.gmra.mxu0 %v511
      %v832 = vpop.f32.mrf.mxu0
      %v833 = vadd.f32 0.0, %v832
      %834 = vmatmul.f32.gmra.mxu0 %v514
      %v835 = vpop.f32.mrf.mxu0
      %v836 = vadd.f32 0.0, %v835
      %837 = vmatmul.f32.gmra.mxu0 %v517
      %v838 = vpop.f32.mrf.mxu0
      %v839 = vadd.f32 0.0, %v838
      %840 = vmatmul.f32.gmra.mxu0 %v520
      %v841 = vpop.f32.mrf.mxu0
      %v842 = vadd.f32 0.0, %v841
      %843 = vmatmul.f32.gmra.mxu0 %v523
      %v844 = vpop.f32.mrf.mxu0
      %v845 = vadd.f32 0.0, %v844
      %846 = vmatmul.f32.gmra.mxu0 %v526
      %v847 = vpop.f32.mrf.mxu0
      %v848 = vadd.f32 0.0, %v847
      %849 = vmatmul.f32.gmra.mxu0 %v529
      %v850 = vpop.f32.mrf.mxu0
      %v851 = vadd.f32 0.0, %v850
      %852 = vmatmul.f32.gmra.mxu0 %v532
      %v853 = vpop.f32.mrf.mxu0
      %v854 = vadd.f32 0.0, %v853
      %855 = vmatmul.f32.gmra.mxu0 %v535
      %v856 = vpop.f32.mrf.mxu0
      %v857 = vadd.f32 0.0, %v856
      %858 = vmatmul.f32.gmra.mxu0 %v538
      %v859 = vpop.f32.mrf.mxu0
      %v860 = vadd.f32 0.0, %v859
      %861 = vmatmul.f32.gmra.mxu0 %v541
      %v862 = vpop.f32.mrf.mxu0
      %v863 = vadd.f32 0.0, %v862
      %864 = vmatmul.f32.gmra.mxu0 %v544
      %v865 = vpop.f32.mrf.mxu0
      %v866 = vadd.f32 0.0, %v865
      %867 = vdwg.mxu0
      %v868 = vmul.f32 %v660, 14.285714
      %v869 = vmul.f32 %v773, 14.285714
      %v870 = vmul.f32 %v663, 14.285714
      %v871 = vmul.f32 %v776, 14.285714
      %v872 = vmul.f32 %v666, 14.285714
      %v873 = vmul.f32 %v779, 14.285714
      %v874 = vmul.f32 %v669, 14.285714
      %v875 = vmul.f32 %v782, 14.285714
      %v876 = vmul.f32 %v672, 14.285714
      %v877 = vmul.f32 %v785, 14.285714
      %v878 = vmul.f32 %v675, 14.285714
      %v879 = vmul.f32 %v788, 14.285714
      %v880 = vmul.f32 %v678, 14.285714
      %v881 = vmul.f32 %v791, 14.285714
      %v882 = vmul.f32 %v681, 14.285714
      %v883 = vmul.f32 %v794, 14.285714
      %v884 = vmul.f32 %v684, 14.285714
      %v885 = vmul.f32 %v797, 14.285714
      %v886 = vmul.f32 %v687, 14.285714
      %v887 = vmul.f32 %v800, 14.285714
      %v888 = vmul.f32 %v690, 14.285714
      %v889 = vmul.f32 %v803, 14.285714
      %v890 = vmul.f32 %v693, 14.285714
      %v891 = vmul.f32 %v806, 14.285714
      %v892 = vmul.f32 %v696, 14.285714
      %v893 = vmul.f32 %v809, 14.285714
      %v894 = vmul.f32 %v699, 14.285714
      %v895 = vmul.f32 %v812, 14.285714
      %v896 = vmul.f32 %v702, 14.285714
      %v897 = vmul.f32 %v815, 14.285714
      %v898 = vmul.f32 %v705, 14.285714
      %v899 = vmul.f32 %v818, 14.285714
      %v900 = vmul.f32 %v708, 14.285714
      %v901 = vmul.f32 %v821, 14.285714
      %v902 = vmul.f32 %v711, 14.285714
      %v903 = vmul.f32 %v824, 14.285714
      %v904 = vmul.f32 %v714, 14.285714
      %v905 = vmul.f32 %v827, 14.285714
      %v906 = vmul.f32 %v717, 14.285714
      %v907 = vmul.f32 %v830, 14.285714
      %v908 = vmul.f32 %v720, 14.285714
      %v909 = vmul.f32 %v833, 14.285714
      %v910 = vmul.f32 %v723, 14.285714
      %v911 = vmul.f32 %v836, 14.285714
      %v912 = vmul.f32 %v726, 14.285714
      %v913 = vmul.f32 %v839, 14.285714
      %v914 = vmul.f32 %v729, 14.285714
      %v915 = vmul.f32 %v842, 14.285714
      %v916 = vmul.f32 %v732, 14.285714
      %v917 = vmul.f32 %v845, 14.285714
      %v918 = vmul.f32 %v735, 14.285714
      %v919 = vmul.f32 %v848, 14.285714
      %v920 = vmul.f32 %v738, 14.285714
      %v921 = vmul.f32 %v851, 14.285714
      %v922 = vmul.f32 %v741, 14.285714
      %v923 = vmul.f32 %v854, 14.285714
      %v924 = vmul.f32 %v744, 14.285714
      %v925 = vmul.f32 %v857, 14.285714
      %v926 = vmul.f32 %v747, 14.285714
      %v927 = vmul.f32 %v860, 14.285714
      %v928 = vmul.f32 %v750, 14.285714
      %v929 = vmul.f32 %v863, 14.285714
      %v930 = vmul.f32 %v753, 14.285714
      %v931 = vmul.f32 %v866, 14.285714
      %v932 = vmul.f32 %v868, 1.442695
      %v933 = vpow.pop %v932
      %v934 = vmul.f32 %v869, 1.442695
      %v935 = vpow.pop %v934
      %v936 = vmul.f32 %v870, 1.442695
      %v937 = vpow.pop %v936
      %v938 = vmul.f32 %v871, 1.442695
      %v939 = vpow.pop %v938
      %v940 = vmul.f32 %v872, 1.442695
      %v941 = vpow.pop %v940
      %v942 = vmul.f32 %v873, 1.442695
      %v943 = vpow.pop %v942
      %v944 = vmul.f32 %v874, 1.442695
      %v945 = vpow.pop %v944
      %v946 = vmul.f32 %v875, 1.442695
      %v947 = vpow.pop %v946
      %v948 = vmul.f32 %v876, 1.442695
      %v949 = vpow.pop %v948
      %v950 = vmul.f32 %v877, 1.442695
      %v951 = vpow.pop %v950
      %v952 = vmul.f32 %v878, 1.442695
      %v953 = vpow.pop %v952
      %v954 = vmul.f32 %v879, 1.442695
      %v955 = vpow.pop %v954
      %v956 = vmul.f32 %v880, 1.442695
      %v957 = vpow.pop %v956
      %v958 = vmul.f32 %v881, 1.442695
      %v959 = vpow.pop %v958
      %v960 = vmul.f32 %v882, 1.442695
      %v961 = vpow.pop %v960
      %v962 = vmul.f32 %v883, 1.442695
      %v963 = vpow.pop %v962
      %v964 = vmul.f32 %v884, 1.442695
      %v965 = vpow.pop %v964
      %v966 = vmul.f32 %v885, 1.442695
      %v967 = vpow.pop %v966
      %v968 = vmul.f32 %v886, 1.442695
      %v969 = vpow.pop %v968
      %v970 = vmul.f32 %v887, 1.442695
      %v971 = vpow.pop %v970
      %v972 = vmul.f32 %v888, 1.442695
      %v973 = vpow.pop %v972
      %v974 = vmul.f32 %v889, 1.442695
      %v975 = vpow.pop %v974
      %v976 = vmul.f32 %v890, 1.442695
      %v977 = vpow.pop %v976
      %v978 = vmul.f32 %v891, 1.442695
      %v979 = vpow.pop %v978
      %v980 = vmul.f32 %v892, 1.442695
      %v981 = vpow.pop %v980
      %v982 = vmul.f32 %v893, 1.442695
      %v983 = vpow.pop %v982
      %v984 = vmul.f32 %v894, 1.442695
      %v985 = vpow.pop %v984
      %v986 = vmul.f32 %v895, 1.442695
      %v987 = vpow.pop %v986
      %v988 = vmul.f32 %v896, 1.442695
      %v989 = vpow.pop %v988
      %v990 = vmul.f32 %v897, 1.442695
      %v991 = vpow.pop %v990
      %v992 = vmul.f32 %v898, 1.442695
      %v993 = vpow.pop %v992
      %v994 = vmul.f32 %v899, 1.442695
      %v995 = vpow.pop %v994
      %v996 = vmul.f32 %v900, 1.442695
      %v997 = vpow.pop %v996
      %v998 = vmul.f32 %v901, 1.442695
      %v999 = vpow.pop %v998
      %v1000 = vmul.f32 %v902, 1.442695
      %v1001 = vpow.pop %v1000
      %v1002 = vmul.f32 %v903, 1.442695
      %v1003 = vpow.pop %v1002
      %v1004 = vmul.f32 %v904, 1.442695
      %v1005 = vpow.pop %v1004
      %v1006 = vmul.f32 %v905, 1.442695
      %v1007 = vpow.pop %v1006
      %v1008 = vmul.f32 %v906, 1.442695
      %v1009 = vpow.pop %v1008
      %v1010 = vmul.f32 %v907, 1.442695
      %v1011 = vpow.pop %v1010
      %v1012 = vmul.f32 %v908, 1.442695
      %v1013 = vpow.pop %v1012
      %v1014 = vmul.f32 %v909, 1.442695
      %v1015 = vpow.pop %v1014
      %v1016 = vmul.f32 %v910, 1.442695
      %v1017 = vpow.pop %v1016
      %v1018 = vmul.f32 %v911, 1.442695
      %v1019 = vpow.pop %v1018
      %v1020 = vmul.f32 %v912, 1.442695
      %v1021 = vpow.pop %v1020
      %v1022 = vmul.f32 %v913, 1.442695
      %v1023 = vpow.pop %v1022
      %v1024 = vmul.f32 %v914, 1.442695
      %v1025 = vpow.pop %v1024
      %v1026 = vmul.f32 %v915, 1.442695
      %v1027 = vpow.pop %v1026
      %v1028 = vmul.f32 %v916, 1.442695
      %v1029 = vpow.pop %v1028
      %v1030 = vmul.f32 %v917, 1.442695
      %v1031 = vpow.pop %v1030
      %v1032 = vmul.f32 %v918, 1.442695
      %v1033 = vpow.pop %v1032
      %v1034 = vmul.f32 %v919, 1.442695
      %v1035 = vpow.pop %v1034
      %v1036 = vmul.f32 %v920, 1.442695
      %v1037 = vpow.pop %v1036
      %v1038 = vmul.f32 %v921, 1.442695
      %v1039 = vpow.pop %v1038
      %v1040 = vmul.f32 %v922, 1.442695
      %v1041 = vpow.pop %v1040
      %v1042 = vmul.f32 %v923, 1.442695
      %v1043 = vpow.pop %v1042
      %v1044 = vmul.f32 %v924, 1.442695
      %v1045 = vpow.pop %v1044
      %v1046 = vmul.f32 %v925, 1.442695
      %v1047 = vpow.pop %v1046
      %v1048 = vmul.f32 %v926, 1.442695
      %v1049 = vpow.pop %v1048
      %v1050 = vmul.f32 %v927, 1.442695
      %v1051 = vpow.pop %v1050
      %v1052 = vmul.f32 %v928, 1.442695
      %v1053 = vpow.pop %v1052
      %v1054 = vmul.f32 %v929, 1.442695
      %v1055 = vpow.pop %v1054
      %v1056 = vmul.f32 %v930, 1.442695
      %v1057 = vpow.pop %v1056
      %v1058 = vmul.f32 %v931, 1.442695
      %v1059 = vpow.pop %v1058
      %v1060 = vld [vmem:[%s298] sm:$0xff]
      %v1061 = vld [vmem:[%s298 + $0x8] sm:$0xff]
      %v1062 = vld [vmem:[%s298 + $0x10] sm:$0xff]
      %v1063 = vld [vmem:[%s298 + $0x18] sm:$0xff]
      %v1064 = vld [vmem:[%s298 + $0x20] sm:$0xff]
      %v1065 = vld [vmem:[%s298 + $0x28] sm:$0xff]
      %v1066 = vld [vmem:[%s298 + $0x30] sm:$0xff]
      %v1067 = vld [vmem:[%s298 + $0x38] sm:$0xff]
      %v1068 = vld [vmem:[%s298 + $0x40] sm:$0xff]
      %v1069 = vld [vmem:[%s298 + $0x48] sm:$0xff]
      %v1070 = vld [vmem:[%s298 + $0x50] sm:$0xff]
      %v1071 = vld [vmem:[%s298 + $0x58] sm:$0xff]
      %v1072 = vld [vmem:[%s298 + $0x60] sm:$0xff]
      %v1073 = vld [vmem:[%s298 + $0x68] sm:$0xff]
      %v1074 = vld [vmem:[%s298 + $0x70] sm:$0xff]
      %v1075 = vld [vmem:[%s298 + $0x78] sm:$0xff]
      %v1076 = vld [vmem:[%s298 + $0x80] sm:$0xff]
      %v1077 = vld [vmem:[%s298 + $0x88] sm:$0xff]
      %v1078 = vld [vmem:[%s298 + $0x90] sm:$0xff]
      %v1079 = vld [vmem:[%s298 + $0x98] sm:$0xff]
      %v1080 = vld [vmem:[%s298 + $0xa0] sm:$0xff]
      %v1081 = vld [vmem:[%s298 + $0xa8] sm:$0xff]
      %v1082 = vld [vmem:[%s298 + $0xb0] sm:$0xff]
      %v1083 = vld [vmem:[%s298 + $0xb8] sm:$0xff]
      %v1084 = vld [vmem:[%s298 + $0xc0] sm:$0xff]
      %v1085 = vld [vmem:[%s298 + $0xc8] sm:$0xff]
      %v1086 = vld [vmem:[%s298 + $0xd0] sm:$0xff]
      %v1087 = vld [vmem:[%s298 + $0xd8] sm:$0xff]
      %v1088 = vld [vmem:[%s298 + $0xe0] sm:$0xff]
      %v1089 = vld [vmem:[%s298 + $0xe8] sm:$0xff]
      %v1090 = vld [vmem:[%s298 + $0xf0] sm:$0xff]
      %v1091 = vld [vmem:[%s298 + $0xf8] sm:$0xff]
      %v1092 = vld [vmem:[%s303] sm:$0x3]
      %vm1093 = vcmp.ne.s32.totalorder %v1092, 2147483648
      %1094 = vset.pattern.permute.xlu0 0
      %1095 = vperm.xlu0 %1094, %v1060
      %v1096 = vpop.permute.xlu0 %1095
      %1097 = vset.pattern.permute.xlu0 0
      %1098 = vperm.xlu0 %1097, %v1061
      %v1099 = vpop.permute.xlu0 %1098
      %1100 = vset.pattern.permute.xlu0 0
      %1101 = vperm.xlu0 %1100, %v1062
      %v1102 = vpop.permute.xlu0 %1101
      %1103 = vset.pattern.permute.xlu0 0
      %1104 = vperm.xlu0 %1103, %v1063
      %v1105 = vpop.permute.xlu0 %1104
      %1106 = vset.pattern.permute.xlu0 0
      %1107 = vperm.xlu0 %1106, %v1064
      %v1108 = vpop.permute.xlu0 %1107
      %1109 = vset.pattern.permute.xlu0 0
      %1110 = vperm.xlu0 %1109, %v1065
      %v1111 = vpop.permute.xlu0 %1110
      %1112 = vset.pattern.permute.xlu0 0
      %1113 = vperm.xlu0 %1112, %v1066
      %v1114 = vpop.permute.xlu0 %1113
      %1115 = vset.pattern.permute.xlu0 0
      %1116 = vperm.xlu0 %1115, %v1067
      %v1117 = vpop.permute.xlu0 %1116
      %1118 = vset.pattern.permute.xlu0 0
      %1119 = vperm.xlu0 %1118, %v1068
      %v1120 = vpop.permute.xlu0 %1119
      %1121 = vset.pattern.permute.xlu0 0
      %1122 = vperm.xlu0 %1121, %v1069
      %v1123 = vpop.permute.xlu0 %1122
      %1124 = vset.pattern.permute.xlu0 0
      %1125 = vperm.xlu0 %1124, %v1070
      %v1126 = vpop.permute.xlu0 %1125
      %1127 = vset.pattern.permute.xlu0 0
      %1128 = vperm.xlu0 %1127, %v1071
      %v1129 = vpop.permute.xlu0 %1128
      %1130 = vset.pattern.permute.xlu0 0
      %1131 = vperm.xlu0 %1130, %v1072
      %v1132 = vpop.permute.xlu0 %1131
      %1133 = vset.pattern.permute.xlu0 0
      %1134 = vperm.xlu0 %1133, %v1073
      %v1135 = vpop.permute.xlu0 %1134
      %1136 = vset.pattern.permute.xlu0 0
      %1137 = vperm.xlu0 %1136, %v1074
      %v1138 = vpop.permute.xlu0 %1137
      %1139 = vset.pattern.permute.xlu0 0
      %1140 = vperm.xlu0 %1139, %v1075
      %v1141 = vpop.permute.xlu0 %1140
      %1142 = vset.pattern.permute.xlu0 0
      %1143 = vperm.xlu0 %1142, %v1076
      %v1144 = vpop.permute.xlu0 %1143
      %1145 = vset.pattern.permute.xlu0 0
      %1146 = vperm.xlu0 %1145, %v1077
      %v1147 = vpop.permute.xlu0 %1146
      %1148 = vset.pattern.permute.xlu0 0
      %1149 = vperm.xlu0 %1148, %v1078
      %v1150 = vpop.permute.xlu0 %1149
      %1151 = vset.pattern.permute.xlu0 0
      %1152 = vperm.xlu0 %1151, %v1079
      %v1153 = vpop.permute.xlu0 %1152
      %1154 = vset.pattern.permute.xlu0 0
      %1155 = vperm.xlu0 %1154, %v1080
      %v1156 = vpop.permute.xlu0 %1155
      %1157 = vset.pattern.permute.xlu0 0
      %1158 = vperm.xlu0 %1157, %v1081
      %v1159 = vpop.permute.xlu0 %1158
      %1160 = vset.pattern.permute.xlu0 0
      %1161 = vperm.xlu0 %1160, %v1082
      %v1162 = vpop.permute.xlu0 %1161
      %1163 = vset.pattern.permute.xlu0 0
      %1164 = vperm.xlu0 %1163, %v1083
      %v1165 = vpop.permute.xlu0 %1164
      %1166 = vset.pattern.permute.xlu0 0
      %1167 = vperm.xlu0 %1166, %v1084
      %v1168 = vpop.permute.xlu0 %1167
      %1169 = vset.pattern.permute.xlu0 0
      %1170 = vperm.xlu0 %1169, %v1085
      %v1171 = vpop.permute.xlu0 %1170
      %1172 = vset.pattern.permute.xlu0 0
      %1173 = vperm.xlu0 %1172, %v1086
      %v1174 = vpop.permute.xlu0 %1173
      %1175 = vset.pattern.permute.xlu0 0
      %1176 = vperm.xlu0 %1175, %v1087
      %v1177 = vpop.permute.xlu0 %1176
      %1178 = vset.pattern.permute.xlu0 0
      %1179 = vperm.xlu0 %1178, %v1088
      %v1180 = vpop.permute.xlu0 %1179
      %1181 = vset.pattern.permute.xlu0 0
      %1182 = vperm.xlu0 %1181, %v1089
      %v1183 = vpop.permute.xlu0 %1182
      %1184 = vset.pattern.permute.xlu0 0
      %1185 = vperm.xlu0 %1184, %v1090
      %v1186 = vpop.permute.xlu0 %1185
      %1187 = vset.pattern.permute.xlu0 0
      %1188 = vperm.xlu0 %1187, %v1091
      %v1189 = vpop.permute.xlu0 %1188
      %v1190 = vperm.slane %v1092, 0
      %v1191 = vperm.slane %v1092, 1
      %vm1192 = vcmp.eq.s32.totalorder %v1096, %v1190
      %vm1193 = vcmp.eq.s32.totalorder %v1096, %v1191
      %vm1194 = vcmp.eq.s32.totalorder %v1099, %v1190
      %vm1195 = vcmp.eq.s32.totalorder %v1099, %v1191
      %vm1196 = vcmp.eq.s32.totalorder %v1102, %v1190
      %vm1197 = vcmp.eq.s32.totalorder %v1102, %v1191
      %vm1198 = vcmp.eq.s32.totalorder %v1105, %v1190
      %vm1199 = vcmp.eq.s32.totalorder %v1105, %v1191
      %vm1200 = vcmp.eq.s32.totalorder %v1108, %v1190
      %vm1201 = vcmp.eq.s32.totalorder %v1108, %v1191
      %vm1202 = vcmp.eq.s32.totalorder %v1111, %v1190
      %vm1203 = vcmp.eq.s32.totalorder %v1111, %v1191
      %vm1204 = vcmp.eq.s32.totalorder %v1114, %v1190
      %vm1205 = vcmp.eq.s32.totalorder %v1114, %v1191
      %vm1206 = vcmp.eq.s32.totalorder %v1117, %v1190
      %vm1207 = vcmp.eq.s32.totalorder %v1117, %v1191
      %vm1208 = vcmp.eq.s32.totalorder %v1120, %v1190
      %vm1209 = vcmp.eq.s32.totalorder %v1120, %v1191
      %vm1210 = vcmp.eq.s32.totalorder %v1123, %v1190
      %vm1211 = vcmp.eq.s32.totalorder %v1123, %v1191
      %vm1212 = vcmp.eq.s32.totalorder %v1126, %v1190
      %vm1213 = vcmp.eq.s32.totalorder %v1126, %v1191
      %vm1214 = vcmp.eq.s32.totalorder %v1129, %v1190
      %vm1215 = vcmp.eq.s32.totalorder %v1129, %v1191
      %vm1216 = vcmp.eq.s32.totalorder %v1132, %v1190
      %vm1217 = vcmp.eq.s32.totalorder %v1132, %v1191
      %vm1218 = vcmp.eq.s32.totalorder %v1135, %v1190
      %vm1219 = vcmp.eq.s32.totalorder %v1135, %v1191
      %vm1220 = vcmp.eq.s32.totalorder %v1138, %v1190
      %vm1221 = vcmp.eq.s32.totalorder %v1138, %v1191
      %vm1222 = vcmp.eq.s32.totalorder %v1141, %v1190
      %vm1223 = vcmp.eq.s32.totalorder %v1141, %v1191
      %vm1224 = vcmp.eq.s32.totalorder %v1144, %v1190
      %vm1225 = vcmp.eq.s32.totalorder %v1144, %v1191
      %vm1226 = vcmp.eq.s32.totalorder %v1147, %v1190
      %vm1227 = vcmp.eq.s32.totalorder %v1147, %v1191
      %vm1228 = vcmp.eq.s32.totalorder %v1150, %v1190
      %vm1229 = vcmp.eq.s32.totalorder %v1150, %v1191
      %vm1230 = vcmp.eq.s32.totalorder %v1153, %v1190
      %vm1231 = vcmp.eq.s32.totalorder %v1153, %v1191
      %vm1232 = vcmp.eq.s32.totalorder %v1156, %v1190
      %vm1233 = vcmp.eq.s32.totalorder %v1156, %v1191
      %vm1234 = vcmp.eq.s32.totalorder %v1159, %v1190
      %vm1235 = vcmp.eq.s32.totalorder %v1159, %v1191
      %vm1236 = vcmp.eq.s32.totalorder %v1162, %v1190
      %vm1237 = vcmp.eq.s32.totalorder %v1162, %v1191
      %vm1238 = vcmp.eq.s32.totalorder %v1165, %v1190
      %vm1239 = vcmp.eq.s32.totalorder %v1165, %v1191
      %vm1240 = vcmp.eq.s32.totalorder %v1168, %v1190
      %vm1241 = vcmp.eq.s32.totalorder %v1168, %v1191
      %vm1242 = vcmp.eq.s32.totalorder %v1171, %v1190
      %vm1243 = vcmp.eq.s32.totalorder %v1171, %v1191
      %vm1244 = vcmp.eq.s32.totalorder %v1174, %v1190
      %vm1245 = vcmp.eq.s32.totalorder %v1174, %v1191
      %vm1246 = vcmp.eq.s32.totalorder %v1177, %v1190
      %vm1247 = vcmp.eq.s32.totalorder %v1177, %v1191
      %vm1248 = vcmp.eq.s32.totalorder %v1180, %v1190
      %vm1249 = vcmp.eq.s32.totalorder %v1180, %v1191
      %vm1250 = vcmp.eq.s32.totalorder %v1183, %v1190
      %vm1251 = vcmp.eq.s32.totalorder %v1183, %v1191
      %vm1252 = vcmp.eq.s32.totalorder %v1186, %v1190
      %vm1253 = vcmp.eq.s32.totalorder %v1186, %v1191
      %vm1254 = vcmp.eq.s32.totalorder %v1189, %v1190
      %vm1255 = vcmp.eq.s32.totalorder %v1189, %v1191
      %v1256 = vsel %vm1093, 1, 0
      %v1257 = vperm.slane %v1256, 0
      %v1258 = vperm.slane %v1256, 1
      %vm1259 = vcmp.eq.s32.totalorder %v1257, 1
      %vm1260 = vcmp.eq.s32.totalorder %v1258, 1
      %v1261 = vsel %vm1259, %v933, 0.0
      %v1262 = vsel %vm1260, %v935, 0.0
      %v1263 = vsel %vm1259, %v937, 0.0
      %v1264 = vsel %vm1260, %v939, 0.0
      %v1265 = vsel %vm1259, %v941, 0.0
      %v1266 = vsel %vm1260, %v943, 0.0
      %v1267 = vsel %vm1259, %v945, 0.0
      %v1268 = vsel %vm1260, %v947, 0.0
      %v1269 = vsel %vm1259, %v949, 0.0
      %v1270 = vsel %vm1260, %v951, 0.0
      %v1271 = vsel %vm1259, %v953, 0.0
      %v1272 = vsel %vm1260, %v955, 0.0
      %v1273 = vsel %vm1259, %v957, 0.0
      %v1274 = vsel %vm1260, %v959, 0.0
      %v1275 = vsel %vm1259, %v961, 0.0
      %v1276 = vsel %vm1260, %v963, 0.0
      %v1277 = vsel %vm1259, %v965, 0.0
      %v1278 = vsel %vm1260, %v967, 0.0
      %v1279 = vsel %vm1259, %v969, 0.0
      %v1280 = vsel %vm1260, %v971, 0.0
      %v1281 = vsel %vm1259, %v973, 0.0
      %v1282 = vsel %vm1260, %v975, 0.0
      %v1283 = vsel %vm1259, %v977, 0.0
      %v1284 = vsel %vm1260, %v979, 0.0
      %v1285 = vsel %vm1259, %v981, 0.0
      %v1286 = vsel %vm1260, %v983, 0.0
      %v1287 = vsel %vm1259, %v985, 0.0
      %v1288 = vsel %vm1260, %v987, 0.0
      %v1289 = vsel %vm1259, %v989, 0.0
      %v1290 = vsel %vm1260, %v991, 0.0
      %v1291 = vsel %vm1259, %v993, 0.0
      %v1292 = vsel %vm1260, %v995, 0.0
      %v1293 = vsel %vm1259, %v997, 0.0
      %v1294 = vsel %vm1260, %v999, 0.0
      %v1295 = vsel %vm1259, %v1001, 0.0
      %v1296 = vsel %vm1260, %v1003, 0.0
      %v1297 = vsel %vm1259, %v1005, 0.0
      %v1298 = vsel %vm1260, %v1007, 0.0
      %v1299 = vsel %vm1259, %v1009, 0.0
      %v1300 = vsel %vm1260, %v1011, 0.0
      %v1301 = vsel %vm1259, %v1013, 0.0
      %v1302 = vsel %vm1260, %v1015, 0.0
      %v1303 = vsel %vm1259, %v1017, 0.0
      %v1304 = vsel %vm1260, %v1019, 0.0
      %v1305 = vsel %vm1259, %v1021, 0.0
      %v1306 = vsel %vm1260, %v1023, 0.0
      %v1307 = vsel %vm1259, %v1025, 0.0
      %v1308 = vsel %vm1260, %v1027, 0.0
      %v1309 = vsel %vm1259, %v1029, 0.0
      %v1310 = vsel %vm1260, %v1031, 0.0
      %v1311 = vsel %vm1259, %v1033, 0.0
      %v1312 = vsel %vm1260, %v1035, 0.0
      %v1313 = vsel %vm1259, %v1037, 0.0
      %v1314 = vsel %vm1260, %v1039, 0.0
      %v1315 = vsel %vm1259, %v1041, 0.0
      %v1316 = vsel %vm1260, %v1043, 0.0
      %v1317 = vsel %vm1259, %v1045, 0.0
      %v1318 = vsel %vm1260, %v1047, 0.0
      %v1319 = vsel %vm1259, %v1049, 0.0
      %v1320 = vsel %vm1260, %v1051, 0.0
      %v1321 = vsel %vm1259, %v1053, 0.0
      %v1322 = vsel %vm1260, %v1055, 0.0
      %v1323 = vsel %vm1259, %v1057, 0.0
      %v1324 = vsel %vm1260, %v1059, 0.0
      %v1325 = vsel %vm1192, %v1261, 0.0
      %v1326 = vsel %vm1193, %v1262, 0.0
      %v1327 = vsel %vm1194, %v1263, 0.0
      %v1328 = vsel %vm1195, %v1264, 0.0
      %v1329 = vsel %vm1196, %v1265, 0.0
      %v1330 = vsel %vm1197, %v1266, 0.0
      %v1331 = vsel %vm1198, %v1267, 0.0
      %v1332 = vsel %vm1199, %v1268, 0.0
      %v1333 = vsel %vm1200, %v1269, 0.0
      %v1334 = vsel %vm1201, %v1270, 0.0
      %v1335 = vsel %vm1202, %v1271, 0.0
      %v1336 = vsel %vm1203, %v1272, 0.0
      %v1337 = vsel %vm1204, %v1273, 0.0
      %v1338 = vsel %vm1205, %v1274, 0.0
      %v1339 = vsel %vm1206, %v1275, 0.0
      %v1340 = vsel %vm1207, %v1276, 0.0
      %v1341 = vsel %vm1208, %v1277, 0.0
      %v1342 = vsel %vm1209, %v1278, 0.0
      %v1343 = vsel %vm1210, %v1279, 0.0
      %v1344 = vsel %vm1211, %v1280, 0.0
      %v1345 = vsel %vm1212, %v1281, 0.0
      %v1346 = vsel %vm1213, %v1282, 0.0
      %v1347 = vsel %vm1214, %v1283, 0.0
      %v1348 = vsel %vm1215, %v1284, 0.0
      %v1349 = vsel %vm1216, %v1285, 0.0
      %v1350 = vsel %vm1217, %v1286, 0.0
      %v1351 = vsel %vm1218, %v1287, 0.0
      %v1352 = vsel %vm1219, %v1288, 0.0
      %v1353 = vsel %vm1220, %v1289, 0.0
      %v1354 = vsel %vm1221, %v1290, 0.0
      %v1355 = vsel %vm1222, %v1291, 0.0
      %v1356 = vsel %vm1223, %v1292, 0.0
      %v1357 = vsel %vm1224, %v1293, 0.0
      %v1358 = vsel %vm1225, %v1294, 0.0
      %v1359 = vsel %vm1226, %v1295, 0.0
      %v1360 = vsel %vm1227, %v1296, 0.0
      %v1361 = vsel %vm1228, %v1297, 0.0
      %v1362 = vsel %vm1229, %v1298, 0.0
      %v1363 = vsel %vm1230, %v1299, 0.0
      %v1364 = vsel %vm1231, %v1300, 0.0
      %v1365 = vsel %vm1232, %v1301, 0.0
      %v1366 = vsel %vm1233, %v1302, 0.0
      %v1367 = vsel %vm1234, %v1303, 0.0
      %v1368 = vsel %vm1235, %v1304, 0.0
      %v1369 = vsel %vm1236, %v1305, 0.0
      %v1370 = vsel %vm1237, %v1306, 0.0
      %v1371 = vsel %vm1238, %v1307, 0.0
      %v1372 = vsel %vm1239, %v1308, 0.0
      %v1373 = vsel %vm1240, %v1309, 0.0
      %v1374 = vsel %vm1241, %v1310, 0.0
      %v1375 = vsel %vm1242, %v1311, 0.0
      %v1376 = vsel %vm1243, %v1312, 0.0
      %v1377 = vsel %vm1244, %v1313, 0.0
      %v1378 = vsel %vm1245, %v1314, 0.0
      %v1379 = vsel %vm1246, %v1315, 0.0
      %v1380 = vsel %vm1247, %v1316, 0.0
      %v1381 = vsel %vm1248, %v1317, 0.0
      %v1382 = vsel %vm1249, %v1318, 0.0
      %v1383 = vsel %vm1250, %v1319, 0.0
      %v1384 = vsel %vm1251, %v1320, 0.0
      %v1385 = vsel %vm1252, %v1321, 0.0
      %v1386 = vsel %vm1253, %v1322, 0.0
      %v1387 = vsel %vm1254, %v1323, 0.0
      %v1388 = vsel %vm1255, %v1324, 0.0
      %p1389 = scmp.ne.s32.totalorder %s21, %s22
      // Predicated region
      $region41: #{tpu_custom_call.1} parent=35 // pred_check
        %p1390 = pneg %p1389
      $region42: #{tpu_custom_call.1} parent=35 // pred_check_branch
        %1392 = sbr.rel (%p1390) target = $region44
      $region43: #{tpu_custom_call.1} parent=35 // pred_region
        %v1393 = vld [vmem:[#allocation3] sm:$0xff]
        %v1394 = vld [vmem:[#allocation3 + $0x8] sm:$0xff]
        %v1395 = vld [vmem:[#allocation3 + $0x10] sm:$0xff]
        %v1396 = vld [vmem:[#allocation3 + $0x18] sm:$0xff]
        %v1397 = vld [vmem:[#allocation3 + $0x20] sm:$0xff]
        %v1398 = vld [vmem:[#allocation3 + $0x28] sm:$0xff]
        %v1399 = vld [vmem:[#allocation3 + $0x30] sm:$0xff]
        %v1400 = vld [vmem:[#allocation3 + $0x38] sm:$0xff]
        %v1401 = vld [vmem:[#allocation3 + $0x40] sm:$0xff]
        %v1402 = vld [vmem:[#allocation3 + $0x48] sm:$0xff]
        %v1403 = vld [vmem:[#allocation3 + $0x50] sm:$0xff]
        %v1404 = vld [vmem:[#allocation3 + $0x58] sm:$0xff]
        %v1405 = vld [vmem:[#allocation3 + $0x60] sm:$0xff]
        %v1406 = vld [vmem:[#allocation3 + $0x68] sm:$0xff]
        %v1407 = vld [vmem:[#allocation3 + $0x70] sm:$0xff]
        %v1408 = vld [vmem:[#allocation3 + $0x78] sm:$0xff]
        %v1409 = vld [vmem:[#allocation3 + $0x80] sm:$0xff]
        %v1410 = vld [vmem:[#allocation3 + $0x88] sm:$0xff]
        %v1411 = vld [vmem:[#allocation3 + $0x90] sm:$0xff]
        %v1412 = vld [vmem:[#allocation3 + $0x98] sm:$0xff]
        %v1413 = vld [vmem:[#allocation3 + $0xa0] sm:$0xff]
        %v1414 = vld [vmem:[#allocation3 + $0xa8] sm:$0xff]
        %v1415 = vld [vmem:[#allocation3 + $0xb0] sm:$0xff]
        %v1416 = vld [vmem:[#allocation3 + $0xb8] sm:$0xff]
        %v1417 = vld [vmem:[#allocation3 + $0xc0] sm:$0xff]
        %v1418 = vld [vmem:[#allocation3 + $0xc8] sm:$0xff]
        %v1419 = vld [vmem:[#allocation3 + $0xd0] sm:$0xff]
        %v1420 = vld [vmem:[#allocation3 + $0xd8] sm:$0xff]
        %v1421 = vld [vmem:[#allocation3 + $0xe0] sm:$0xff]
        %v1422 = vld [vmem:[#allocation3 + $0xe8] sm:$0xff]
        %v1423 = vld [vmem:[#allocation3 + $0xf0] sm:$0xff]
        %v1424 = vld [vmem:[#allocation3 + $0xf8] sm:$0xff]
        %v1425 = vadd.f32 %v1261, %v1262
        %v1426 = vadd.f32 %v1263, %v1264
        %v1427 = vadd.f32 %v1265, %v1266
        %v1428 = vadd.f32 %v1267, %v1268
        %v1429 = vadd.f32 %v1269, %v1270
        %v1430 = vadd.f32 %v1271, %v1272
        %v1431 = vadd.f32 %v1273, %v1274
        %v1432 = vadd.f32 %v1275, %v1276
        %v1433 = vadd.f32 %v1277, %v1278
        %v1434 = vadd.f32 %v1279, %v1280
        %v1435 = vadd.f32 %v1281, %v1282
        %v1436 = vadd.f32 %v1283, %v1284
        %v1437 = vadd.f32 %v1285, %v1286
        %v1438 = vadd.f32 %v1287, %v1288
        %v1439 = vadd.f32 %v1289, %v1290
        %v1440 = vadd.f32 %v1291, %v1292
        %v1441 = vadd.f32 %v1293, %v1294
        %v1442 = vadd.f32 %v1295, %v1296
        %v1443 = vadd.f32 %v1297, %v1298
        %v1444 = vadd.f32 %v1299, %v1300
        %v1445 = vadd.f32 %v1301, %v1302
        %v1446 = vadd.f32 %v1303, %v1304
        %v1447 = vadd.f32 %v1305, %v1306
        %v1448 = vadd.f32 %v1307, %v1308
        %v1449 = vadd.f32 %v1309, %v1310
        %v1450 = vadd.f32 %v1311, %v1312
        %v1451 = vadd.f32 %v1313, %v1314
        %v1452 = vadd.f32 %v1315, %v1316
        %v1453 = vadd.f32 %v1317, %v1318
        %v1454 = vadd.f32 %v1319, %v1320
        %v1455 = vadd.f32 %v1321, %v1322
        %v1456 = vadd.f32 %v1323, %v1324
        %v1457 = vadd.f32 %v1393, %v1425
        %v1458 = vadd.f32 %v1394, %v1426
        %v1459 = vadd.f32 %v1395, %v1427
        %v1460 = vadd.f32 %v1396, %v1428
        %v1461 = vadd.f32 %v1397, %v1429
        %v1462 = vadd.f32 %v1398, %v1430
        %v1463 = vadd.f32 %v1399, %v1431
        %v1464 = vadd.f32 %v1400, %v1432
        %v1465 = vadd.f32 %v1401, %v1433
        %v1466 = vadd.f32 %v1402, %v1434
        %v1467 = vadd.f32 %v1403, %v1435
        %v1468 = vadd.f32 %v1404, %v1436
        %v1469 = vadd.f32 %v1405, %v1437
        %v1470 = vadd.f32 %v1406, %v1438
        %v1471 = vadd.f32 %v1407, %v1439
        %v1472 = vadd.f32 %v1408, %v1440
        %v1473 = vadd.f32 %v1409, %v1441
        %v1474 = vadd.f32 %v1410, %v1442
        %v1475 = vadd.f32 %v1411, %v1443
        %v1476 = vadd.f32 %v1412, %v1444
        %v1477 = vadd.f32 %v1413, %v1445
        %v1478 = vadd.f32 %v1414, %v1446
        %v1479 = vadd.f32 %v1415, %v1447
        %v1480 = vadd.f32 %v1416, %v1448
        %v1481 = vadd.f32 %v1417, %v1449
        %v1482 = vadd.f32 %v1418, %v1450
        %v1483 = vadd.f32 %v1419, %v1451
        %v1484 = vadd.f32 %v1420, %v1452
        %v1485 = vadd.f32 %v1421, %v1453
        %v1486 = vadd.f32 %v1422, %v1454
        %v1487 = vadd.f32 %v1423, %v1455
        %v1488 = vadd.f32 %v1424, %v1456
        %1489 = vst [vmem:[#allocation3] sm:$0xff] %v1457
        %1490 = vst [vmem:[#allocation3 + $0x8] sm:$0xff] %v1458
        %1491 = vst [vmem:[#allocation3 + $0x10] sm:$0xff] %v1459
        %1492 = vst [vmem:[#allocation3 + $0x18] sm:$0xff] %v1460
        %1493 = vst [vmem:[#allocation3 + $0x20] sm:$0xff] %v1461
        %1494 = vst [vmem:[#allocation3 + $0x28] sm:$0xff] %v1462
        %1495 = vst [vmem:[#allocation3 + $0x30] sm:$0xff] %v1463
        %1496 = vst [vmem:[#allocation3 + $0x38] sm:$0xff] %v1464
        %1497 = vst [vmem:[#allocation3 + $0x40] sm:$0xff] %v1465
        %1498 = vst [vmem:[#allocation3 + $0x48] sm:$0xff] %v1466
        %1499 = vst [vmem:[#allocation3 + $0x50] sm:$0xff] %v1467
        %1500 = vst [vmem:[#allocation3 + $0x58] sm:$0xff] %v1468
        %1501 = vst [vmem:[#allocation3 + $0x60] sm:$0xff] %v1469
        %1502 = vst [vmem:[#allocation3 + $0x68] sm:$0xff] %v1470
        %1503 = vst [vmem:[#allocation3 + $0x70] sm:$0xff] %v1471
        %1504 = vst [vmem:[#allocation3 + $0x78] sm:$0xff] %v1472
        %1505 = vst [vmem:[#allocation3 + $0x80] sm:$0xff] %v1473
        %1506 = vst [vmem:[#allocation3 + $0x88] sm:$0xff] %v1474
        %1507 = vst [vmem:[#allocation3 + $0x90] sm:$0xff] %v1475
        %1508 = vst [vmem:[#allocation3 + $0x98] sm:$0xff] %v1476
        %1509 = vst [vmem:[#allocation3 + $0xa0] sm:$0xff] %v1477
        %1510 = vst [vmem:[#allocation3 + $0xa8] sm:$0xff] %v1478
        %1511 = vst [vmem:[#allocation3 + $0xb0] sm:$0xff] %v1479
        %1512 = vst [vmem:[#allocation3 + $0xb8] sm:$0xff] %v1480
        %1513 = vst [vmem:[#allocation3 + $0xc0] sm:$0xff] %v1481
        %1514 = vst [vmem:[#allocation3 + $0xc8] sm:$0xff] %v1482
        %1515 = vst [vmem:[#allocation3 + $0xd0] sm:$0xff] %v1483
        %1516 = vst [vmem:[#allocation3 + $0xd8] sm:$0xff] %v1484
        %1517 = vst [vmem:[#allocation3 + $0xe0] sm:$0xff] %v1485
        %1518 = vst [vmem:[#allocation3 + $0xe8] sm:$0xff] %v1486
        %1519 = vst [vmem:[#allocation3 + $0xf0] sm:$0xff] %v1487
        %1520 = vst [vmem:[#allocation3 + $0xf8] sm:$0xff] %v1488
        %v1521 = vld [vmem:[#allocation2] sm:$0xff]
        %v1522 = vld [vmem:[#allocation2 + $0x8] sm:$0xff]
        %v1523 = vld [vmem:[#allocation2 + $0x10] sm:$0xff]
        %v1524 = vld [vmem:[#allocation2 + $0x18] sm:$0xff]
        %v1525 = vld [vmem:[#allocation2 + $0x20] sm:$0xff]
        %v1526 = vld [vmem:[#allocation2 + $0x28] sm:$0xff]
        %v1527 = vld [vmem:[#allocation2 + $0x30] sm:$0xff]
        %v1528 = vld [vmem:[#allocation2 + $0x38] sm:$0xff]
        %v1529 = vld [vmem:[#allocation2 + $0x40] sm:$0xff]
        %v1530 = vld [vmem:[#allocation2 + $0x48] sm:$0xff]
        %v1531 = vld [vmem:[#allocation2 + $0x50] sm:$0xff]
        %v1532 = vld [vmem:[#allocation2 + $0x58] sm:$0xff]
        %v1533 = vld [vmem:[#allocation2 + $0x60] sm:$0xff]
        %v1534 = vld [vmem:[#allocation2 + $0x68] sm:$0xff]
        %v1535 = vld [vmem:[#allocation2 + $0x70] sm:$0xff]
        %v1536 = vld [vmem:[#allocation2 + $0x78] sm:$0xff]
        %v1537 = vld [vmem:[#allocation2 + $0x80] sm:$0xff]
        %v1538 = vld [vmem:[#allocation2 + $0x88] sm:$0xff]
        %v1539 = vld [vmem:[#allocation2 + $0x90] sm:$0xff]
        %v1540 = vld [vmem:[#allocation2 + $0x98] sm:$0xff]
        %v1541 = vld [vmem:[#allocation2 + $0xa0] sm:$0xff]
        %v1542 = vld [vmem:[#allocation2 + $0xa8] sm:$0xff]
        %v1543 = vld [vmem:[#allocation2 + $0xb0] sm:$0xff]
        %v1544 = vld [vmem:[#allocation2 + $0xb8] sm:$0xff]
        %v1545 = vld [vmem:[#allocation2 + $0xc0] sm:$0xff]
        %v1546 = vld [vmem:[#allocation2 + $0xc8] sm:$0xff]
        %v1547 = vld [vmem:[#allocation2 + $0xd0] sm:$0xff]
        %v1548 = vld [vmem:[#allocation2 + $0xd8] sm:$0xff]
        %v1549 = vld [vmem:[#allocation2 + $0xe0] sm:$0xff]
        %v1550 = vld [vmem:[#allocation2 + $0xe8] sm:$0xff]
        %v1551 = vld [vmem:[#allocation2 + $0xf0] sm:$0xff]
        %v1552 = vld [vmem:[#allocation2 + $0xf8] sm:$0xff]
        %v1553 = vadd.f32 %v1325, %v1326
        %v1554 = vadd.f32 %v1327, %v1328
        %v1555 = vadd.f32 %v1329, %v1330
        %v1556 = vadd.f32 %v1331, %v1332
        %v1557 = vadd.f32 %v1333, %v1334
        %v1558 = vadd.f32 %v1335, %v1336
        %v1559 = vadd.f32 %v1337, %v1338
        %v1560 = vadd.f32 %v1339, %v1340
        %v1561 = vadd.f32 %v1341, %v1342
        %v1562 = vadd.f32 %v1343, %v1344
        %v1563 = vadd.f32 %v1345, %v1346
        %v1564 = vadd.f32 %v1347, %v1348
        %v1565 = vadd.f32 %v1349, %v1350
        %v1566 = vadd.f32 %v1351, %v1352
        %v1567 = vadd.f32 %v1353, %v1354
        %v1568 = vadd.f32 %v1355, %v1356
        %v1569 = vadd.f32 %v1357, %v1358
        %v1570 = vadd.f32 %v1359, %v1360
        %v1571 = vadd.f32 %v1361, %v1362
        %v1572 = vadd.f32 %v1363, %v1364
        %v1573 = vadd.f32 %v1365, %v1366
        %v1574 = vadd.f32 %v1367, %v1368
        %v1575 = vadd.f32 %v1369, %v1370
        %v1576 = vadd.f32 %v1371, %v1372
        %v1577 = vadd.f32 %v1373, %v1374
        %v1578 = vadd.f32 %v1375, %v1376
        %v1579 = vadd.f32 %v1377, %v1378
        %v1580 = vadd.f32 %v1379, %v1380
        %v1581 = vadd.f32 %v1381, %v1382
        %v1582 = vadd.f32 %v1383, %v1384
        %v1583 = vadd.f32 %v1385, %v1386
        %v1584 = vadd.f32 %v1387, %v1388
        %v1585 = vadd.f32 %v1521, %v1553
        %v1586 = vadd.f32 %v1522, %v1554
        %v1587 = vadd.f32 %v1523, %v1555
        %v1588 = vadd.f32 %v1524, %v1556
        %v1589 = vadd.f32 %v1525, %v1557
        %v1590 = vadd.f32 %v1526, %v1558
        %v1591 = vadd.f32 %v1527, %v1559
        %v1592 = vadd.f32 %v1528, %v1560
        %v1593 = vadd.f32 %v1529, %v1561
        %v1594 = vadd.f32 %v1530, %v1562
        %v1595 = vadd.f32 %v1531, %v1563
        %v1596 = vadd.f32 %v1532, %v1564
        %v1597 = vadd.f32 %v1533, %v1565
        %v1598 = vadd.f32 %v1534, %v1566
        %v1599 = vadd.f32 %v1535, %v1567
        %v1600 = vadd.f32 %v1536, %v1568
        %v1601 = vadd.f32 %v1537, %v1569
        %v1602 = vadd.f32 %v1538, %v1570
        %v1603 = vadd.f32 %v1539, %v1571
        %v1604 = vadd.f32 %v1540, %v1572
        %v1605 = vadd.f32 %v1541, %v1573
        %v1606 = vadd.f32 %v1542, %v1574
        %v1607 = vadd.f32 %v1543, %v1575
        %v1608 = vadd.f32 %v1544, %v1576
        %v1609 = vadd.f32 %v1545, %v1577
        %v1610 = vadd.f32 %v1546, %v1578
        %v1611 = vadd.f32 %v1547, %v1579
        %v1612 = vadd.f32 %v1548, %v1580
        %v1613 = vadd.f32 %v1549, %v1581
        %v1614 = vadd.f32 %v1550, %v1582
        %v1615 = vadd.f32 %v1551, %v1583
        %v1616 = vadd.f32 %v1552, %v1584
        %1617 = vst [vmem:[#allocation2] sm:$0xff] %v1585
        %1618 = vst [vmem:[#allocation2 + $0x8] sm:$0xff] %v1586
        %1619 = vst [vmem:[#allocation2 + $0x10] sm:$0xff] %v1587
        %1620 = vst [vmem:[#allocation2 + $0x18] sm:$0xff] %v1588
        %1621 = vst [vmem:[#allocation2 + $0x20] sm:$0xff] %v1589
        %1622 = vst [vmem:[#allocation2 + $0x28] sm:$0xff] %v1590
        %1623 = vst [vmem:[#allocation2 + $0x30] sm:$0xff] %v1591
        %1624 = vst [vmem:[#allocation2 + $0x38] sm:$0xff] %v1592
        %1625 = vst [vmem:[#allocation2 + $0x40] sm:$0xff] %v1593
        %1626 = vst [vmem:[#allocation2 + $0x48] sm:$0xff] %v1594
        %1627 = vst [vmem:[#allocation2 + $0x50] sm:$0xff] %v1595
        %1628 = vst [vmem:[#allocation2 + $0x58] sm:$0xff] %v1596
        %1629 = vst [vmem:[#allocation2 + $0x60] sm:$0xff] %v1597
        %1630 = vst [vmem:[#allocation2 + $0x68] sm:$0xff] %v1598
        %1631 = vst [vmem:[#allocation2 + $0x70] sm:$0xff] %v1599
        %1632 = vst [vmem:[#allocation2 + $0x78] sm:$0xff] %v1600
        %1633 = vst [vmem:[#allocation2 + $0x80] sm:$0xff] %v1601
        %1634 = vst [vmem:[#allocation2 + $0x88] sm:$0xff] %v1602
        %1635 = vst [vmem:[#allocation2 + $0x90] sm:$0xff] %v1603
        %1636 = vst [vmem:[#allocation2 + $0x98] sm:$0xff] %v1604
        %1637 = vst [vmem:[#allocation2 + $0xa0] sm:$0xff] %v1605
        %1638 = vst [vmem:[#allocation2 + $0xa8] sm:$0xff] %v1606
        %1639 = vst [vmem:[#allocation2 + $0xb0] sm:$0xff] %v1607
        %1640 = vst [vmem:[#allocation2 + $0xb8] sm:$0xff] %v1608
        %1641 = vst [vmem:[#allocation2 + $0xc0] sm:$0xff] %v1609
        %1642 = vst [vmem:[#allocation2 + $0xc8] sm:$0xff] %v1610
        %1643 = vst [vmem:[#allocation2 + $0xd0] sm:$0xff] %v1611
        %1644 = vst [vmem:[#allocation2 + $0xd8] sm:$0xff] %v1612
        %1645 = vst [vmem:[#allocation2 + $0xe0] sm:$0xff] %v1613
        %1646 = vst [vmem:[#allocation2 + $0xe8] sm:$0xff] %v1614
        %1647 = vst [vmem:[#allocation2 + $0xf0] sm:$0xff] %v1615
        %1648 = vst [vmem:[#allocation2 + $0xf8] sm:$0xff] %v1616
      $region44: #{tpu_custom_call.1} parent=35 // pred_fallthru
        _
      %p1649 = scmp.eq.s32.totalorder %s21, %s22
      // Predicated region
      $region45: #{tpu_custom_call.1} parent=35 // pred_check
        %p1650 = pneg %p1649
      $region46: #{tpu_custom_call.1} parent=35 // pred_check_branch
        %1652 = sbr.rel (%p1650) target = $region48
      $region47: #{tpu_custom_call.1} parent=35 // pred_region
        %v1653 = vlaneseq
        %v1654 = vshrl.u32 %v1653, 7
        %v1655 = vadd.s32 %v1654, 8
        %v1656 = vadd.s32 %v1654, 16
        %v1657 = vadd.s32 %v1654, 24
        %v1658 = vadd.s32 %v1654, 32
        %v1659 = vadd.s32 %v1654, 40
        %v1660 = vadd.s32 %v1654, 48
        %v1661 = vadd.s32 %v1654, 56
        %v1662 = vadd.s32 %v1654, 64
        %v1663 = vadd.s32 %v1654, 72
        %v1664 = vadd.s32 %v1654, 80
        %v1665 = vadd.s32 %v1654, 88
        %v1666 = vadd.s32 %v1654, 96
        %v1667 = vadd.s32 %v1654, 104
        %v1668 = vadd.s32 %v1654, 112
        %v1669 = vadd.s32 %v1654, 120
        %v1670 = vadd.s32 %v1654, 128
        %v1671 = vadd.s32 %v1654, 136
        %v1672 = vadd.s32 %v1654, 144
        %v1673 = vadd.s32 %v1654, 152
        %v1674 = vadd.s32 %v1654, 160
        %v1675 = vadd.s32 %v1654, 168
        %v1676 = vadd.s32 %v1654, 176
        %v1677 = vadd.s32 %v1654, 184
        %v1678 = vadd.s32 %v1654, 192
        %v1679 = vadd.s32 %v1654, 200
        %v1680 = vadd.s32 %v1654, 208
        %v1681 = vadd.s32 %v1654, 216
        %v1682 = vadd.s32 %v1654, 224
        %v1683 = vadd.s32 %v1654, 232
        %v1684 = vadd.s32 %v1654, 240
        %v1685 = vadd.s32 %v1654, 248
        %v1686 = vlaneseq
        %v1687 = vand.u32 %v1686, 127
        %v1688 = vadd.s32 %v1687, 128
        %vm1689 = vcmp.ne.s32.totalorder %v1654, %v1687
        %vm1690 = vcmp.ne.s32.totalorder %v1654, %v1688
        %vm1691 = vcmp.ne.s32.totalorder %v1655, %v1687
        %vm1692 = vcmp.ne.s32.totalorder %v1655, %v1688
        %vm1693 = vcmp.ne.s32.totalorder %v1656, %v1687
        %vm1694 = vcmp.ne.s32.totalorder %v1656, %v1688
        %vm1695 = vcmp.ne.s32.totalorder %v1657, %v1687
        %vm1696 = vcmp.ne.s32.totalorder %v1657, %v1688
        %vm1697 = vcmp.ne.s32.totalorder %v1658, %v1687
        %vm1698 = vcmp.ne.s32.totalorder %v1658, %v1688
        %vm1699 = vcmp.ne.s32.totalorder %v1659, %v1687
        %vm1700 = vcmp.ne.s32.totalorder %v1659, %v1688
        %vm1701 = vcmp.ne.s32.totalorder %v1660, %v1687
        %vm1702 = vcmp.ne.s32.totalorder %v1660, %v1688
        %vm1703 = vcmp.ne.s32.totalorder %v1661, %v1687
        %vm1704 = vcmp.ne.s32.totalorder %v1661, %v1688
        %vm1705 = vcmp.ne.s32.totalorder %v1662, %v1687
        %vm1706 = vcmp.ne.s32.totalorder %v1662, %v1688
        %vm1707 = vcmp.ne.s32.totalorder %v1663, %v1687
        %vm1708 = vcmp.ne.s32.totalorder %v1663, %v1688
        %vm1709 = vcmp.ne.s32.totalorder %v1664, %v1687
        %vm1710 = vcmp.ne.s32.totalorder %v1664, %v1688
        %vm1711 = vcmp.ne.s32.totalorder %v1665, %v1687
        %vm1712 = vcmp.ne.s32.totalorder %v1665, %v1688
        %vm1713 = vcmp.ne.s32.totalorder %v1666, %v1687
        %vm1714 = vcmp.ne.s32.totalorder %v1666, %v1688
        %vm1715 = vcmp.ne.s32.totalorder %v1667, %v1687
        %vm1716 = vcmp.ne.s32.totalorder %v1667, %v1688
        %vm1717 = vcmp.ne.s32.totalorder %v1668, %v1687
        %vm1718 = vcmp.ne.s32.totalorder %v1668, %v1688
        %vm1719 = vcmp.ne.s32.totalorder %v1669, %v1687
        %vm1720 = vcmp.ne.s32.totalorder %v1669, %v1688
        %vm1721 = vcmp.ne.s32.totalorder %v1670, %v1687
        %vm1722 = vcmp.ne.s32.totalorder %v1670, %v1688
        %vm1723 = vcmp.ne.s32.totalorder %v1671, %v1687
        %vm1724 = vcmp.ne.s32.totalorder %v1671, %v1688
        %vm1725 = vcmp.ne.s32.totalorder %v1672, %v1687
        %vm1726 = vcmp.ne.s32.totalorder %v1672, %v1688
        %vm1727 = vcmp.ne.s32.totalorder %v1673, %v1687
        %vm1728 = vcmp.ne.s32.totalorder %v1673, %v1688
        %vm1729 = vcmp.ne.s32.totalorder %v1674, %v1687
        %vm1730 = vcmp.ne.s32.totalorder %v1674, %v1688
        %vm1731 = vcmp.ne.s32.totalorder %v1675, %v1687
        %vm1732 = vcmp.ne.s32.totalorder %v1675, %v1688
        %vm1733 = vcmp.ne.s32.totalorder %v1676, %v1687
        %vm1734 = vcmp.ne.s32.totalorder %v1676, %v1688
        %vm1735 = vcmp.ne.s32.totalorder %v1677, %v1687
        %vm1736 = vcmp.ne.s32.totalorder %v1677, %v1688
        %vm1737 = vcmp.ne.s32.totalorder %v1678, %v1687
        %vm1738 = vcmp.ne.s32.totalorder %v1678, %v1688
        %vm1739 = vcmp.ne.s32.totalorder %v1679, %v1687
        %vm1740 = vcmp.ne.s32.totalorder %v1679, %v1688
        %vm1741 = vcmp.ne.s32.totalorder %v1680, %v1687
        %vm1742 = vcmp.ne.s32.totalorder %v1680, %v1688
        %vm1743 = vcmp.ne.s32.totalorder %v1681, %v1687
        %vm1744 = vcmp.ne.s32.totalorder %v1681, %v1688
        %vm1745 = vcmp.ne.s32.totalorder %v1682, %v1687
        %vm1746 = vcmp.ne.s32.totalorder %v1682, %v1688
        %vm1747 = vcmp.ne.s32.totalorder %v1683, %v1687
        %vm1748 = vcmp.ne.s32.totalorder %v1683, %v1688
        %vm1749 = vcmp.ne.s32.totalorder %v1684, %v1687
        %vm1750 = vcmp.ne.s32.totalorder %v1684, %v1688
        %vm1751 = vcmp.ne.s32.totalorder %v1685, %v1687
        %vm1752 = vcmp.ne.s32.totalorder %v1685, %v1688
        %v1753 = vld [vmem:[#allocation3] sm:$0xff]
        %v1754 = vld [vmem:[#allocation3 + $0x8] sm:$0xff]
        %v1755 = vld [vmem:[#allocation3 + $0x10] sm:$0xff]
        %v1756 = vld [vmem:[#allocation3 + $0x18] sm:$0xff]
        %v1757 = vld [vmem:[#allocation3 + $0x20] sm:$0xff]
        %v1758 = vld [vmem:[#allocation3 + $0x28] sm:$0xff]
        %v1759 = vld [vmem:[#allocation3 + $0x30] sm:$0xff]
        %v1760 = vld [vmem:[#allocation3 + $0x38] sm:$0xff]
        %v1761 = vld [vmem:[#allocation3 + $0x40] sm:$0xff]
        %v1762 = vld [vmem:[#allocation3 + $0x48] sm:$0xff]
        %v1763 = vld [vmem:[#allocation3 + $0x50] sm:$0xff]
        %v1764 = vld [vmem:[#allocation3 + $0x58] sm:$0xff]
        %v1765 = vld [vmem:[#allocation3 + $0x60] sm:$0xff]
        %v1766 = vld [vmem:[#allocation3 + $0x68] sm:$0xff]
        %v1767 = vld [vmem:[#allocation3 + $0x70] sm:$0xff]
        %v1768 = vld [vmem:[#allocation3 + $0x78] sm:$0xff]
        %v1769 = vld [vmem:[#allocation3 + $0x80] sm:$0xff]
        %v1770 = vld [vmem:[#allocation3 + $0x88] sm:$0xff]
        %v1771 = vld [vmem:[#allocation3 + $0x90] sm:$0xff]
        %v1772 = vld [vmem:[#allocation3 + $0x98] sm:$0xff]
        %v1773 = vld [vmem:[#allocation3 + $0xa0] sm:$0xff]
        %v1774 = vld [vmem:[#allocation3 + $0xa8] sm:$0xff]
        %v1775 = vld [vmem:[#allocation3 + $0xb0] sm:$0xff]
        %v1776 = vld [vmem:[#allocation3 + $0xb8] sm:$0xff]
        %v1777 = vld [vmem:[#allocation3 + $0xc0] sm:$0xff]
        %v1778 = vld [vmem:[#allocation3 + $0xc8] sm:$0xff]
        %v1779 = vld [vmem:[#allocation3 + $0xd0] sm:$0xff]
        %v1780 = vld [vmem:[#allocation3 + $0xd8] sm:$0xff]
        %v1781 = vld [vmem:[#allocation3 + $0xe0] sm:$0xff]
        %v1782 = vld [vmem:[#allocation3 + $0xe8] sm:$0xff]
        %v1783 = vld [vmem:[#allocation3 + $0xf0] sm:$0xff]
        %v1784 = vld [vmem:[#allocation3 + $0xf8] sm:$0xff]
        %v1785 = vsel %vm1689, %v1261, 0.0
        %v1786 = vsel %vm1690, %v1262, 0.0
        %v1787 = vsel %vm1691, %v1263, 0.0
        %v1788 = vsel %vm1692, %v1264, 0.0
        %v1789 = vsel %vm1693, %v1265, 0.0
        %v1790 = vsel %vm1694, %v1266, 0.0
        %v1791 = vsel %vm1695, %v1267, 0.0
        %v1792 = vsel %vm1696, %v1268, 0.0
        %v1793 = vsel %vm1697, %v1269, 0.0
        %v1794 = vsel %vm1698, %v1270, 0.0
        %v1795 = vsel %vm1699, %v1271, 0.0
        %v1796 = vsel %vm1700, %v1272, 0.0
        %v1797 = vsel %vm1701, %v1273, 0.0
        %v1798 = vsel %vm1702, %v1274, 0.0
        %v1799 = vsel %vm1703, %v1275, 0.0
        %v1800 = vsel %vm1704, %v1276, 0.0
        %v1801 = vsel %vm1705, %v1277, 0.0
        %v1802 = vsel %vm1706, %v1278, 0.0
        %v1803 = vsel %vm1707, %v1279, 0.0
        %v1804 = vsel %vm1708, %v1280, 0.0
        %v1805 = vsel %vm1709, %v1281, 0.0
        %v1806 = vsel %vm1710, %v1282, 0.0
        %v1807 = vsel %vm1711, %v1283, 0.0
        %v1808 = vsel %vm1712, %v1284, 0.0
        %v1809 = vsel %vm1713, %v1285, 0.0
        %v1810 = vsel %vm1714, %v1286, 0.0
        %v1811 = vsel %vm1715, %v1287, 0.0
        %v1812 = vsel %vm1716, %v1288, 0.0
        %v1813 = vsel %vm1717, %v1289, 0.0
        %v1814 = vsel %vm1718, %v1290, 0.0
        %v1815 = vsel %vm1719, %v1291, 0.0
        %v1816 = vsel %vm1720, %v1292, 0.0
        %v1817 = vsel %vm1721, %v1293, 0.0
        %v1818 = vsel %vm1722, %v1294, 0.0
        %v1819 = vsel %vm1723, %v1295, 0.0
        %v1820 = vsel %vm1724, %v1296, 0.0
        %v1821 = vsel %vm1725, %v1297, 0.0
        %v1822 = vsel %vm1726, %v1298, 0.0
        %v1823 = vsel %vm1727, %v1299, 0.0
        %v1824 = vsel %vm1728, %v1300, 0.0
        %v1825 = vsel %vm1729, %v1301, 0.0
        %v1826 = vsel %vm1730, %v1302, 0.0
        %v1827 = vsel %vm1731, %v1303, 0.0
        %v1828 = vsel %vm1732, %v1304, 0.0
        %v1829 = vsel %vm1733, %v1305, 0.0
        %v1830 = vsel %vm1734, %v1306, 0.0
        %v1831 = vsel %vm1735, %v1307, 0.0
        %v1832 = vsel %vm1736, %v1308, 0.0
        %v1833 = vsel %vm1737, %v1309, 0.0
        %v1834 = vsel %vm1738, %v1310, 0.0
        %v1835 = vsel %vm1739, %v1311, 0.0
        %v1836 = vsel %vm1740, %v1312, 0.0
        %v1837 = vsel %vm1741, %v1313, 0.0
        %v1838 = vsel %vm1742, %v1314, 0.0
        %v1839 = vsel %vm1743, %v1315, 0.0
        %v1840 = vsel %vm1744, %v1316, 0.0
        %v1841 = vsel %vm1745, %v1317, 0.0
        %v1842 = vsel %vm1746, %v1318, 0.0
        %v1843 = vsel %vm1747, %v1319, 0.0
        %v1844 = vsel %vm1748, %v1320, 0.0
        %v1845 = vsel %vm1749, %v1321, 0.0
        %v1846 = vsel %vm1750, %v1322, 0.0
        %v1847 = vsel %vm1751, %v1323, 0.0
        %v1848 = vsel %vm1752, %v1324, 0.0
        %v1849 = vadd.f32 %v1785, %v1786
        %v1850 = vadd.f32 %v1787, %v1788
        %v1851 = vadd.f32 %v1789, %v1790
        %v1852 = vadd.f32 %v1791, %v1792
        %v1853 = vadd.f32 %v1793, %v1794
        %v1854 = vadd.f32 %v1795, %v1796
        %v1855 = vadd.f32 %v1797, %v1798
        %v1856 = vadd.f32 %v1799, %v1800
        %v1857 = vadd.f32 %v1801, %v1802
        %v1858 = vadd.f32 %v1803, %v1804
        %v1859 = vadd.f32 %v1805, %v1806
        %v1860 = vadd.f32 %v1807, %v1808
        %v1861 = vadd.f32 %v1809, %v1810
        %v1862 = vadd.f32 %v1811, %v1812
        %v1863 = vadd.f32 %v1813, %v1814
        %v1864 = vadd.f32 %v1815, %v1816
        %v1865 = vadd.f32 %v1817, %v1818
        %v1866 = vadd.f32 %v1819, %v1820
        %v1867 = vadd.f32 %v1821, %v1822
        %v1868 = vadd.f32 %v1823, %v1824
        %v1869 = vadd.f32 %v1825, %v1826
        %v1870 = vadd.f32 %v1827, %v1828
        %v1871 = vadd.f32 %v1829, %v1830
        %v1872 = vadd.f32 %v1831, %v1832
        %v1873 = vadd.f32 %v1833, %v1834
        %v1874 = vadd.f32 %v1835, %v1836
        %v1875 = vadd.f32 %v1837, %v1838
        %v1876 = vadd.f32 %v1839, %v1840
        %v1877 = vadd.f32 %v1841, %v1842
        %v1878 = vadd.f32 %v1843, %v1844
        %v1879 = vadd.f32 %v1845, %v1846
        %v1880 = vadd.f32 %v1847, %v1848
        %v1881 = vadd.f32 %v1753, %v1849
        %v1882 = vadd.f32 %v1754, %v1850
        %v1883 = vadd.f32 %v1755, %v1851
        %v1884 = vadd.f32 %v1756, %v1852
        %v1885 = vadd.f32 %v1757, %v1853
        %v1886 = vadd.f32 %v1758, %v1854
        %v1887 = vadd.f32 %v1759, %v1855
        %v1888 = vadd.f32 %v1760, %v1856
        %v1889 = vadd.f32 %v1761, %v1857
        %v1890 = vadd.f32 %v1762, %v1858
        %v1891 = vadd.f32 %v1763, %v1859
        %v1892 = vadd.f32 %v1764, %v1860
        %v1893 = vadd.f32 %v1765, %v1861
        %v1894 = vadd.f32 %v1766, %v1862
        %v1895 = vadd.f32 %v1767, %v1863
        %v1896 = vadd.f32 %v1768, %v1864
        %v1897 = vadd.f32 %v1769, %v1865
        %v1898 = vadd.f32 %v1770, %v1866
        %v1899 = vadd.f32 %v1771, %v1867
        %v1900 = vadd.f32 %v1772, %v1868
        %v1901 = vadd.f32 %v1773, %v1869
        %v1902 = vadd.f32 %v1774, %v1870
        %v1903 = vadd.f32 %v1775, %v1871
        %v1904 = vadd.f32 %v1776, %v1872
        %v1905 = vadd.f32 %v1777, %v1873
        %v1906 = vadd.f32 %v1778, %v1874
        %v1907 = vadd.f32 %v1779, %v1875
        %v1908 = vadd.f32 %v1780, %v1876
        %v1909 = vadd.f32 %v1781, %v1877
        %v1910 = vadd.f32 %v1782, %v1878
        %v1911 = vadd.f32 %v1783, %v1879
        %v1912 = vadd.f32 %v1784, %v1880
        %1913 = vst [vmem:[#allocation3] sm:$0xff] %v1881
        %1914 = vst [vmem:[#allocation3 + $0x8] sm:$0xff] %v1882
        %1915 = vst [vmem:[#allocation3 + $0x10] sm:$0xff] %v1883
        %1916 = vst [vmem:[#allocation3 + $0x18] sm:$0xff] %v1884
        %1917 = vst [vmem:[#allocation3 + $0x20] sm:$0xff] %v1885
        %1918 = vst [vmem:[#allocation3 + $0x28] sm:$0xff] %v1886
        %1919 = vst [vmem:[#allocation3 + $0x30] sm:$0xff] %v1887
        %1920 = vst [vmem:[#allocation3 + $0x38] sm:$0xff] %v1888
        %1921 = vst [vmem:[#allocation3 + $0x40] sm:$0xff] %v1889
        %1922 = vst [vmem:[#allocation3 + $0x48] sm:$0xff] %v1890
        %1923 = vst [vmem:[#allocation3 + $0x50] sm:$0xff] %v1891
        %1924 = vst [vmem:[#allocation3 + $0x58] sm:$0xff] %v1892
        %1925 = vst [vmem:[#allocation3 + $0x60] sm:$0xff] %v1893
        %1926 = vst [vmem:[#allocation3 + $0x68] sm:$0xff] %v1894
        %1927 = vst [vmem:[#allocation3 + $0x70] sm:$0xff] %v1895
        %1928 = vst [vmem:[#allocation3 + $0x78] sm:$0xff] %v1896
        %1929 = vst [vmem:[#allocation3 + $0x80] sm:$0xff] %v1897
        %1930 = vst [vmem:[#allocation3 + $0x88] sm:$0xff] %v1898
        %1931 = vst [vmem:[#allocation3 + $0x90] sm:$0xff] %v1899
        %1932 = vst [vmem:[#allocation3 + $0x98] sm:$0xff] %v1900
        %1933 = vst [vmem:[#allocation3 + $0xa0] sm:$0xff] %v1901
        %1934 = vst [vmem:[#allocation3 + $0xa8] sm:$0xff] %v1902
        %1935 = vst [vmem:[#allocation3 + $0xb0] sm:$0xff] %v1903
        %1936 = vst [vmem:[#allocation3 + $0xb8] sm:$0xff] %v1904
        %1937 = vst [vmem:[#allocation3 + $0xc0] sm:$0xff] %v1905
        %1938 = vst [vmem:[#allocation3 + $0xc8] sm:$0xff] %v1906
        %1939 = vst [vmem:[#allocation3 + $0xd0] sm:$0xff] %v1907
        %1940 = vst [vmem:[#allocation3 + $0xd8] sm:$0xff] %v1908
        %1941 = vst [vmem:[#allocation3 + $0xe0] sm:$0xff] %v1909
        %1942 = vst [vmem:[#allocation3 + $0xe8] sm:$0xff] %v1910
        %1943 = vst [vmem:[#allocation3 + $0xf0] sm:$0xff] %v1911
        %1944 = vst [vmem:[#allocation3 + $0xf8] sm:$0xff] %v1912
        %v1945 = vld [vmem:[#allocation2] sm:$0xff]
        %v1946 = vld [vmem:[#allocation2 + $0x8] sm:$0xff]
        %v1947 = vld [vmem:[#allocation2 + $0x10] sm:$0xff]
        %v1948 = vld [vmem:[#allocation2 + $0x18] sm:$0xff]
        %v1949 = vld [vmem:[#allocation2 + $0x20] sm:$0xff]
        %v1950 = vld [vmem:[#allocation2 + $0x28] sm:$0xff]
        %v1951 = vld [vmem:[#allocation2 + $0x30] sm:$0xff]
        %v1952 = vld [vmem:[#allocation2 + $0x38] sm:$0xff]
        %v1953 = vld [vmem:[#allocation2 + $0x40] sm:$0xff]
        %v1954 = vld [vmem:[#allocation2 + $0x48] sm:$0xff]
        %v1955 = vld [vmem:[#allocation2 + $0x50] sm:$0xff]
        %v1956 = vld [vmem:[#allocation2 + $0x58] sm:$0xff]
        %v1957 = vld [vmem:[#allocation2 + $0x60] sm:$0xff]
        %v1958 = vld [vmem:[#allocation2 + $0x68] sm:$0xff]
        %v1959 = vld [vmem:[#allocation2 + $0x70] sm:$0xff]
        %v1960 = vld [vmem:[#allocation2 + $0x78] sm:$0xff]
        %v1961 = vld [vmem:[#allocation2 + $0x80] sm:$0xff]
        %v1962 = vld [vmem:[#allocation2 + $0x88] sm:$0xff]
        %v1963 = vld [vmem:[#allocation2 + $0x90] sm:$0xff]
        %v1964 = vld [vmem:[#allocation2 + $0x98] sm:$0xff]
        %v1965 = vld [vmem:[#allocation2 + $0xa0] sm:$0xff]
        %v1966 = vld [vmem:[#allocation2 + $0xa8] sm:$0xff]
        %v1967 = vld [vmem:[#allocation2 + $0xb0] sm:$0xff]
        %v1968 = vld [vmem:[#allocation2 + $0xb8] sm:$0xff]
        %v1969 = vld [vmem:[#allocation2 + $0xc0] sm:$0xff]
        %v1970 = vld [vmem:[#allocation2 + $0xc8] sm:$0xff]
        %v1971 = vld [vmem:[#allocation2 + $0xd0] sm:$0xff]
        %v1972 = vld [vmem:[#allocation2 + $0xd8] sm:$0xff]
        %v1973 = vld [vmem:[#allocation2 + $0xe0] sm:$0xff]
        %v1974 = vld [vmem:[#allocation2 + $0xe8] sm:$0xff]
        %v1975 = vld [vmem:[#allocation2 + $0xf0] sm:$0xff]
        %v1976 = vld [vmem:[#allocation2 + $0xf8] sm:$0xff]
        %v1977 = vsel %vm1689, %v1325, 0.0
        %v1978 = vsel %vm1690, %v1326, 0.0
        %v1979 = vsel %vm1691, %v1327, 0.0
        %v1980 = vsel %vm1692, %v1328, 0.0
        %v1981 = vsel %vm1693, %v1329, 0.0
        %v1982 = vsel %vm1694, %v1330, 0.0
        %v1983 = vsel %vm1695, %v1331, 0.0
        %v1984 = vsel %vm1696, %v1332, 0.0
        %v1985 = vsel %vm1697, %v1333, 0.0
        %v1986 = vsel %vm1698, %v1334, 0.0
        %v1987 = vsel %vm1699, %v1335, 0.0
        %v1988 = vsel %vm1700, %v1336, 0.0
        %v1989 = vsel %vm1701, %v1337, 0.0
        %v1990 = vsel %vm1702, %v1338, 0.0
        %v1991 = vsel %vm1703, %v1339, 0.0
        %v1992 = vsel %vm1704, %v1340, 0.0
        %v1993 = vsel %vm1705, %v1341, 0.0
        %v1994 = vsel %vm1706, %v1342, 0.0
        %v1995 = vsel %vm1707, %v1343, 0.0
        %v1996 = vsel %vm1708, %v1344, 0.0
        %v1997 = vsel %vm1709, %v1345, 0.0
        %v1998 = vsel %vm1710, %v1346, 0.0
        %v1999 = vsel %vm1711, %v1347, 0.0
        %v2000 = vsel %vm1712, %v1348, 0.0
        %v2001 = vsel %vm1713, %v1349, 0.0
        %v2002 = vsel %vm1714, %v1350, 0.0
        %v2003 = vsel %vm1715, %v1351, 0.0
        %v2004 = vsel %vm1716, %v1352, 0.0
        %v2005 = vsel %vm1717, %v1353, 0.0
        %v2006 = vsel %vm1718, %v1354, 0.0
        %v2007 = vsel %vm1719, %v1355, 0.0
        %v2008 = vsel %vm1720, %v1356, 0.0
        %v2009 = vsel %vm1721, %v1357, 0.0
        %v2010 = vsel %vm1722, %v1358, 0.0
        %v2011 = vsel %vm1723, %v1359, 0.0
        %v2012 = vsel %vm1724, %v1360, 0.0
        %v2013 = vsel %vm1725, %v1361, 0.0
        %v2014 = vsel %vm1726, %v1362, 0.0
        %v2015 = vsel %vm1727, %v1363, 0.0
        %v2016 = vsel %vm1728, %v1364, 0.0
        %v2017 = vsel %vm1729, %v1365, 0.0
        %v2018 = vsel %vm1730, %v1366, 0.0
        %v2019 = vsel %vm1731, %v1367, 0.0
        %v2020 = vsel %vm1732, %v1368, 0.0
        %v2021 = vsel %vm1733, %v1369, 0.0
        %v2022 = vsel %vm1734, %v1370, 0.0
        %v2023 = vsel %vm1735, %v1371, 0.0
        %v2024 = vsel %vm1736, %v1372, 0.0
        %v2025 = vsel %vm1737, %v1373, 0.0
        %v2026 = vsel %vm1738, %v1374, 0.0
        %v2027 = vsel %vm1739, %v1375, 0.0
        %v2028 = vsel %vm1740, %v1376, 0.0
        %v2029 = vsel %vm1741, %v1377, 0.0
        %v2030 = vsel %vm1742, %v1378, 0.0
        %v2031 = vsel %vm1743, %v1379, 0.0
        %v2032 = vsel %vm1744, %v1380, 0.0
        %v2033 = vsel %vm1745, %v1381, 0.0
        %v2034 = vsel %vm1746, %v1382, 0.0
        %v2035 = vsel %vm1747, %v1383, 0.0
        %v2036 = vsel %vm1748, %v1384, 0.0
        %v2037 = vsel %vm1749, %v1385, 0.0
        %v2038 = vsel %vm1750, %v1386, 0.0
        %v2039 = vsel %vm1751, %v1387, 0.0
        %v2040 = vsel %vm1752, %v1388, 0.0
        %v2041 = vadd.f32 %v1977, %v1978
        %v2042 = vadd.f32 %v1979, %v1980
        %v2043 = vadd.f32 %v1981, %v1982
        %v2044 = vadd.f32 %v1983, %v1984
        %v2045 = vadd.f32 %v1985, %v1986
        %v2046 = vadd.f32 %v1987, %v1988
        %v2047 = vadd.f32 %v1989, %v1990
        %v2048 = vadd.f32 %v1991, %v1992
        %v2049 = vadd.f32 %v1993, %v1994
        %v2050 = vadd.f32 %v1995, %v1996
        %v2051 = vadd.f32 %v1997, %v1998
        %v2052 = vadd.f32 %v1999, %v2000
        %v2053 = vadd.f32 %v2001, %v2002
        %v2054 = vadd.f32 %v2003, %v2004
        %v2055 = vadd.f32 %v2005, %v2006
        %v2056 = vadd.f32 %v2007, %v2008
        %v2057 = vadd.f32 %v2009, %v2010
        %v2058 = vadd.f32 %v2011, %v2012
        %v2059 = vadd.f32 %v2013, %v2014
        %v2060 = vadd.f32 %v2015, %v2016
        %v2061 = vadd.f32 %v2017, %v2018
        %v2062 = vadd.f32 %v2019, %v2020
        %v2063 = vadd.f32 %v2021, %v2022
        %v2064 = vadd.f32 %v2023, %v2024
        %v2065 = vadd.f32 %v2025, %v2026
        %v2066 = vadd.f32 %v2027, %v2028
        %v2067 = vadd.f32 %v2029, %v2030
        %v2068 = vadd.f32 %v2031, %v2032
        %v2069 = vadd.f32 %v2033, %v2034
        %v2070 = vadd.f32 %v2035, %v2036
        %v2071 = vadd.f32 %v2037, %v2038
        %v2072 = vadd.f32 %v2039, %v2040
        %v2073 = vadd.f32 %v1945, %v2041
        %v2074 = vadd.f32 %v1946, %v2042
        %v2075 = vadd.f32 %v1947, %v2043
        %v2076 = vadd.f32 %v1948, %v2044
        %v2077 = vadd.f32 %v1949, %v2045
        %v2078 = vadd.f32 %v1950, %v2046
        %v2079 = vadd.f32 %v1951, %v2047
        %v2080 = vadd.f32 %v1952, %v2048
        %v2081 = vadd.f32 %v1953, %v2049
        %v2082 = vadd.f32 %v1954, %v2050
        %v2083 = vadd.f32 %v1955, %v2051
        %v2084 = vadd.f32 %v1956, %v2052
        %v2085 = vadd.f32 %v1957, %v2053
        %v2086 = vadd.f32 %v1958, %v2054
        %v2087 = vadd.f32 %v1959, %v2055
        %v2088 = vadd.f32 %v1960, %v2056
        %v2089 = vadd.f32 %v1961, %v2057
        %v2090 = vadd.f32 %v1962, %v2058
        %v2091 = vadd.f32 %v1963, %v2059
        %v2092 = vadd.f32 %v1964, %v2060
        %v2093 = vadd.f32 %v1965, %v2061
        %v2094 = vadd.f32 %v1966, %v2062
        %v2095 = vadd.f32 %v1967, %v2063
        %v2096 = vadd.f32 %v1968, %v2064
        %v2097 = vadd.f32 %v1969, %v2065
        %v2098 = vadd.f32 %v1970, %v2066
        %v2099 = vadd.f32 %v1971, %v2067
        %v2100 = vadd.f32 %v1972, %v2068
        %v2101 = vadd.f32 %v1973, %v2069
        %v2102 = vadd.f32 %v1974, %v2070
        %v2103 = vadd.f32 %v1975, %v2071
        %v2104 = vadd.f32 %v1976, %v2072
        %2105 = vst [vmem:[#allocation2] sm:$0xff] %v2073
        %2106 = vst [vmem:[#allocation2 + $0x8] sm:$0xff] %v2074
        %2107 = vst [vmem:[#allocation2 + $0x10] sm:$0xff] %v2075
        %2108 = vst [vmem:[#allocation2 + $0x18] sm:$0xff] %v2076
        %2109 = vst [vmem:[#allocation2 + $0x20] sm:$0xff] %v2077
        %2110 = vst [vmem:[#allocation2 + $0x28] sm:$0xff] %v2078
        %2111 = vst [vmem:[#allocation2 + $0x30] sm:$0xff] %v2079
        %2112 = vst [vmem:[#allocation2 + $0x38] sm:$0xff] %v2080
        %2113 = vst [vmem:[#allocation2 + $0x40] sm:$0xff] %v2081
        %2114 = vst [vmem:[#allocation2 + $0x48] sm:$0xff] %v2082
        %2115 = vst [vmem:[#allocation2 + $0x50] sm:$0xff] %v2083
        %2116 = vst [vmem:[#allocation2 + $0x58] sm:$0xff] %v2084
        %2117 = vst [vmem:[#allocation2 + $0x60] sm:$0xff] %v2085
        %2118 = vst [vmem:[#allocation2 + $0x68] sm:$0xff] %v2086
        %2119 = vst [vmem:[#allocation2 + $0x70] sm:$0xff] %v2087
        %2120 = vst [vmem:[#allocation2 + $0x78] sm:$0xff] %v2088
        %2121 = vst [vmem:[#allocation2 + $0x80] sm:$0xff] %v2089
        %2122 = vst [vmem:[#allocation2 + $0x88] sm:$0xff] %v2090
        %2123 = vst [vmem:[#allocation2 + $0x90] sm:$0xff] %v2091
        %2124 = vst [vmem:[#allocation2 + $0x98] sm:$0xff] %v2092
        %2125 = vst [vmem:[#allocation2 + $0xa0] sm:$0xff] %v2093
        %2126 = vst [vmem:[#allocation2 + $0xa8] sm:$0xff] %v2094
        %2127 = vst [vmem:[#allocation2 + $0xb0] sm:$0xff] %v2095
        %2128 = vst [vmem:[#allocation2 + $0xb8] sm:$0xff] %v2096
        %2129 = vst [vmem:[#allocation2 + $0xc0] sm:$0xff] %v2097
        %2130 = vst [vmem:[#allocation2 + $0xc8] sm:$0xff] %v2098
        %2131 = vst [vmem:[#allocation2 + $0xd0] sm:$0xff] %v2099
        %2132 = vst [vmem:[#allocation2 + $0xd8] sm:$0xff] %v2100
        %2133 = vst [vmem:[#allocation2 + $0xe0] sm:$0xff] %v2101
        %2134 = vst [vmem:[#allocation2 + $0xe8] sm:$0xff] %v2102
        %2135 = vst [vmem:[#allocation2 + $0xf0] sm:$0xff] %v2103
        %2136 = vst [vmem:[#allocation2 + $0xf8] sm:$0xff] %v2104
      $region48: #{tpu_custom_call.1} parent=35 // pred_fallthru
        _
      %p2137 = scmp.eq.s32.totalorder %s22, 1
      // Predicated region
      $region49: #{tpu_custom_call.1} parent=35 // pred_check
        %p2138 = pneg %p2137
      $region50: #{tpu_custom_call.1} parent=35 // pred_check_branch
        %2140 = sbr.rel (%p2138) target = $region52
      $region51: #{tpu_custom_call.1} parent=35 // pred_region
        %v2141 = vld [vmem:[#allocation2] sm:$0xff]
        %v2142 = vld [vmem:[#allocation2 + $0x8] sm:$0xff]
        %v2143 = vld [vmem:[#allocation2 + $0x10] sm:$0xff]
        %v2144 = vld [vmem:[#allocation2 + $0x18] sm:$0xff]
        %v2145 = vld [vmem:[#allocation2 + $0x20] sm:$0xff]
        %v2146 = vld [vmem:[#allocation2 + $0x28] sm:$0xff]
        %v2147 = vld [vmem:[#allocation2 + $0x30] sm:$0xff]
        %v2148 = vld [vmem:[#allocation2 + $0x38] sm:$0xff]
        %v2149 = vld [vmem:[#allocation2 + $0x40] sm:$0xff]
        %v2150 = vld [vmem:[#allocation2 + $0x48] sm:$0xff]
        %v2151 = vld [vmem:[#allocation2 + $0x50] sm:$0xff]
        %v2152 = vld [vmem:[#allocation2 + $0x58] sm:$0xff]
        %v2153 = vld [vmem:[#allocation2 + $0x60] sm:$0xff]
        %v2154 = vld [vmem:[#allocation2 + $0x68] sm:$0xff]
        %v2155 = vld [vmem:[#allocation2 + $0x70] sm:$0xff]
        %v2156 = vld [vmem:[#allocation2 + $0x78] sm:$0xff]
        %v2157 = vld [vmem:[#allocation2 + $0x80] sm:$0xff]
        %v2158 = vld [vmem:[#allocation2 + $0x88] sm:$0xff]
        %v2159 = vld [vmem:[#allocation2 + $0x90] sm:$0xff]
        %v2160 = vld [vmem:[#allocation2 + $0x98] sm:$0xff]
        %v2161 = vld [vmem:[#allocation2 + $0xa0] sm:$0xff]
        %v2162 = vld [vmem:[#allocation2 + $0xa8] sm:$0xff]
        %v2163 = vld [vmem:[#allocation2 + $0xb0] sm:$0xff]
        %v2164 = vld [vmem:[#allocation2 + $0xb8] sm:$0xff]
        %v2165 = vld [vmem:[#allocation2 + $0xc0] sm:$0xff]
        %v2166 = vld [vmem:[#allocation2 + $0xc8] sm:$0xff]
        %v2167 = vld [vmem:[#allocation2 + $0xd0] sm:$0xff]
        %v2168 = vld [vmem:[#allocation2 + $0xd8] sm:$0xff]
        %v2169 = vld [vmem:[#allocation2 + $0xe0] sm:$0xff]
        %v2170 = vld [vmem:[#allocation2 + $0xe8] sm:$0xff]
        %v2171 = vld [vmem:[#allocation2 + $0xf0] sm:$0xff]
        %v2172 = vld [vmem:[#allocation2 + $0xf8] sm:$0xff]
        %2173 = vadd.xlane.f32.xlu0 %v2141
        %v2174 = vpop.xlane.xlu0 %2173
        %2175 = vadd.xlane.f32.xlu0 %v2142
        %v2176 = vpop.xlane.xlu0 %2175
        %2177 = vadd.xlane.f32.xlu0 %v2143
        %v2178 = vpop.xlane.xlu0 %2177
        %2179 = vadd.xlane.f32.xlu0 %v2144
        %v2180 = vpop.xlane.xlu0 %2179
        %2181 = vadd.xlane.f32.xlu0 %v2145
        %v2182 = vpop.xlane.xlu0 %2181
        %2183 = vadd.xlane.f32.xlu0 %v2146
        %v2184 = vpop.xlane.xlu0 %2183
        %2185 = vadd.xlane.f32.xlu0 %v2147
        %v2186 = vpop.xlane.xlu0 %2185
        %2187 = vadd.xlane.f32.xlu0 %v2148
        %v2188 = vpop.xlane.xlu0 %2187
        %2189 = vadd.xlane.f32.xlu0 %v2149
        %v2190 = vpop.xlane.xlu0 %2189
        %2191 = vadd.xlane.f32.xlu0 %v2150
        %v2192 = vpop.xlane.xlu0 %2191
        %2193 = vadd.xlane.f32.xlu0 %v2151
        %v2194 = vpop.xlane.xlu0 %2193
        %2195 = vadd.xlane.f32.xlu0 %v2152
        %v2196 = vpop.xlane.xlu0 %2195
        %2197 = vadd.xlane.f32.xlu0 %v2153
        %v2198 = vpop.xlane.xlu0 %2197
        %2199 = vadd.xlane.f32.xlu0 %v2154
        %v2200 = vpop.xlane.xlu0 %2199
        %2201 = vadd.xlane.f32.xlu0 %v2155
        %v2202 = vpop.xlane.xlu0 %2201
        %2203 = vadd.xlane.f32.xlu0 %v2156
        %v2204 = vpop.xlane.xlu0 %2203
        %2205 = vadd.xlane.f32.xlu0 %v2157
        %v2206 = vpop.xlane.xlu0 %2205
        %2207 = vadd.xlane.f32.xlu0 %v2158
        %v2208 = vpop.xlane.xlu0 %2207
        %2209 = vadd.xlane.f32.xlu0 %v2159
        %v2210 = vpop.xlane.xlu0 %2209
        %2211 = vadd.xlane.f32.xlu0 %v2160
        %v2212 = vpop.xlane.xlu0 %2211
        %2213 = vadd.xlane.f32.xlu0 %v2161
        %v2214 = vpop.xlane.xlu0 %2213
        %2215 = vadd.xlane.f32.xlu0 %v2162
        %v2216 = vpop.xlane.xlu0 %2215
        %2217 = vadd.xlane.f32.xlu0 %v2163
        %v2218 = vpop.xlane.xlu0 %2217
        %2219 = vadd.xlane.f32.xlu0 %v2164
        %v2220 = vpop.xlane.xlu0 %2219
        %2221 = vadd.xlane.f32.xlu0 %v2165
        %v2222 = vpop.xlane.xlu0 %2221
        %2223 = vadd.xlane.f32.xlu0 %v2166
        %v2224 = vpop.xlane.xlu0 %2223
        %2225 = vadd.xlane.f32.xlu0 %v2167
        %v2226 = vpop.xlane.xlu0 %2225
        %2227 = vadd.xlane.f32.xlu0 %v2168
        %v2228 = vpop.xlane.xlu0 %2227
        %2229 = vadd.xlane.f32.xlu0 %v2169
        %v2230 = vpop.xlane.xlu0 %2229
        %2231 = vadd.xlane.f32.xlu0 %v2170
        %v2232 = vpop.xlane.xlu0 %2231
        %2233 = vadd.xlane.f32.xlu0 %v2171
        %v2234 = vpop.xlane.xlu0 %2233
        %2235 = vadd.xlane.f32.xlu0 %v2172
        %v2236 = vpop.xlane.xlu0 %2235
        %vm2237 = vcmask 7168
        %2238 = vst.msk [vmem:[%s309] sm:$0xff] %vm2237, %v2174
        %2239 = vst.msk [vmem:[%s309 + $0x8] sm:$0xff] %vm2237, %v2176
        %2240 = vst.msk [vmem:[%s309 + $0x10] sm:$0xff] %vm2237, %v2178
        %2241 = vst.msk [vmem:[%s309 + $0x18] sm:$0xff] %vm2237, %v2180
        %2242 = vst.msk [vmem:[%s309 + $0x20] sm:$0xff] %vm2237, %v2182
        %2243 = vst.msk [vmem:[%s309 + $0x28] sm:$0xff] %vm2237, %v2184
        %2244 = vst.msk [vmem:[%s309 + $0x30] sm:$0xff] %vm2237, %v2186
        %2245 = vst.msk [vmem:[%s309 + $0x38] sm:$0xff] %vm2237, %v2188
        %2246 = vst.msk [vmem:[%s309 + $0x40] sm:$0xff] %vm2237, %v2190
        %2247 = vst.msk [vmem:[%s309 + $0x48] sm:$0xff] %vm2237, %v2192
        %2248 = vst.msk [vmem:[%s309 + $0x50] sm:$0xff] %vm2237, %v2194
        %2249 = vst.msk [vmem:[%s309 + $0x58] sm:$0xff] %vm2237, %v2196
        %2250 = vst.msk [vmem:[%s309 + $0x60] sm:$0xff] %vm2237, %v2198
        %2251 = vst.msk [vmem:[%s309 + $0x68] sm:$0xff] %vm2237, %v2200
        %2252 = vst.msk [vmem:[%s309 + $0x70] sm:$0xff] %vm2237, %v2202
        %2253 = vst.msk [vmem:[%s309 + $0x78] sm:$0xff] %vm2237, %v2204
        %2254 = vst.msk [vmem:[%s309 + $0x80] sm:$0xff] %vm2237, %v2206
        %2255 = vst.msk [vmem:[%s309 + $0x88] sm:$0xff] %vm2237, %v2208
        %2256 = vst.msk [vmem:[%s309 + $0x90] sm:$0xff] %vm2237, %v2210
        %2257 = vst.msk [vmem:[%s309 + $0x98] sm:$0xff] %vm2237, %v2212
        %2258 = vst.msk [vmem:[%s309 + $0xa0] sm:$0xff] %vm2237, %v2214
        %2259 = vst.msk [vmem:[%s309 + $0xa8] sm:$0xff] %vm2237, %v2216
        %2260 = vst.msk [vmem:[%s309 + $0xb0] sm:$0xff] %vm2237, %v2218
        %2261 = vst.msk [vmem:[%s309 + $0xb8] sm:$0xff] %vm2237, %v2220
        %2262 = vst.msk [vmem:[%s309 + $0xc0] sm:$0xff] %vm2237, %v2222
        %2263 = vst.msk [vmem:[%s309 + $0xc8] sm:$0xff] %vm2237, %v2224
        %2264 = vst.msk [vmem:[%s309 + $0xd0] sm:$0xff] %vm2237, %v2226
        %2265 = vst.msk [vmem:[%s309 + $0xd8] sm:$0xff] %vm2237, %v2228
        %2266 = vst.msk [vmem:[%s309 + $0xe0] sm:$0xff] %vm2237, %v2230
        %2267 = vst.msk [vmem:[%s309 + $0xe8] sm:$0xff] %vm2237, %v2232
        %2268 = vst.msk [vmem:[%s309 + $0xf0] sm:$0xff] %vm2237, %v2234
        %2269 = vst.msk [vmem:[%s309 + $0xf8] sm:$0xff] %vm2237, %v2236
        %v2270 = vld [vmem:[#allocation3] sm:$0xff]
        %v2271 = vld [vmem:[#allocation3 + $0x8] sm:$0xff]
        %v2272 = vld [vmem:[#allocation3 + $0x10] sm:$0xff]
        %v2273 = vld [vmem:[#allocation3 + $0x18] sm:$0xff]
        %v2274 = vld [vmem:[#allocation3 + $0x20] sm:$0xff]
        %v2275 = vld [vmem:[#allocation3 + $0x28] sm:$0xff]
        %v2276 = vld [vmem:[#allocation3 + $0x30] sm:$0xff]
        %v2277 = vld [vmem:[#allocation3 + $0x38] sm:$0xff]
        %v2278 = vld [vmem:[#allocation3 + $0x40] sm:$0xff]
        %v2279 = vld [vmem:[#allocation3 + $0x48] sm:$0xff]
        %v2280 = vld [vmem:[#allocation3 + $0x50] sm:$0xff]
        %v2281 = vld [vmem:[#allocation3 + $0x58] sm:$0xff]
        %v2282 = vld [vmem:[#allocation3 + $0x60] sm:$0xff]
        %v2283 = vld [vmem:[#allocation3 + $0x68] sm:$0xff]
        %v2284 = vld [vmem:[#allocation3 + $0x70] sm:$0xff]
        %v2285 = vld [vmem:[#allocation3 + $0x78] sm:$0xff]
        %v2286 = vld [vmem:[#allocation3 + $0x80] sm:$0xff]
        %v2287 = vld [vmem:[#allocation3 + $0x88] sm:$0xff]
        %v2288 = vld [vmem:[#allocation3 + $0x90] sm:$0xff]
        %v2289 = vld [vmem:[#allocation3 + $0x98] sm:$0xff]
        %v2290 = vld [vmem:[#allocation3 + $0xa0] sm:$0xff]
        %v2291 = vld [vmem:[#allocation3 + $0xa8] sm:$0xff]
        %v2292 = vld [vmem:[#allocation3 + $0xb0] sm:$0xff]
        %v2293 = vld [vmem:[#allocation3 + $0xb8] sm:$0xff]
        %v2294 = vld [vmem:[#allocation3 + $0xc0] sm:$0xff]
        %v2295 = vld [vmem:[#allocation3 + $0xc8] sm:$0xff]
        %v2296 = vld [vmem:[#allocation3 + $0xd0] sm:$0xff]
        %v2297 = vld [vmem:[#allocation3 + $0xd8] sm:$0xff]
        %v2298 = vld [vmem:[#allocation3 + $0xe0] sm:$0xff]
        %v2299 = vld [vmem:[#allocation3 + $0xe8] sm:$0xff]
        %v2300 = vld [vmem:[#allocation3 + $0xf0] sm:$0xff]
        %v2301 = vld [vmem:[#allocation3 + $0xf8] sm:$0xff]
        %2302 = vadd.xlane.f32.xlu0 %v2270
        %v2303 = vpop.xlane.xlu0 %2302
        %2304 = vadd.xlane.f32.xlu0 %v2271
        %v2305 = vpop.xlane.xlu0 %2304
        %2306 = vadd.xlane.f32.xlu0 %v2272
        %v2307 = vpop.xlane.xlu0 %2306
        %2308 = vadd.xlane.f32.xlu0 %v2273
        %v2309 = vpop.xlane.xlu0 %2308
        %2310 = vadd.xlane.f32.xlu0 %v2274
        %v2311 = vpop.xlane.xlu0 %2310
        %2312 = vadd.xlane.f32.xlu0 %v2275
        %v2313 = vpop.xlane.xlu0 %2312
        %2314 = vadd.xlane.f32.xlu0 %v2276
        %v2315 = vpop.xlane.xlu0 %2314
        %2316 = vadd.xlane.f32.xlu0 %v2277
        %v2317 = vpop.xlane.xlu0 %2316
        %2318 = vadd.xlane.f32.xlu0 %v2278
        %v2319 = vpop.xlane.xlu0 %2318
        %2320 = vadd.xlane.f32.xlu0 %v2279
        %v2321 = vpop.xlane.xlu0 %2320
        %2322 = vadd.xlane.f32.xlu0 %v2280
        %v2323 = vpop.xlane.xlu0 %2322
        %2324 = vadd.xlane.f32.xlu0 %v2281
        %v2325 = vpop.xlane.xlu0 %2324
        %2326 = vadd.xlane.f32.xlu0 %v2282
        %v2327 = vpop.xlane.xlu0 %2326
        %2328 = vadd.xlane.f32.xlu0 %v2283
        %v2329 = vpop.xlane.xlu0 %2328
        %2330 = vadd.xlane.f32.xlu0 %v2284
        %v2331 = vpop.xlane.xlu0 %2330
        %2332 = vadd.xlane.f32.xlu0 %v2285
        %v2333 = vpop.xlane.xlu0 %2332
        %2334 = vadd.xlane.f32.xlu0 %v2286
        %v2335 = vpop.xlane.xlu0 %2334
        %2336 = vadd.xlane.f32.xlu0 %v2287
        %v2337 = vpop.xlane.xlu0 %2336
        %2338 = vadd.xlane.f32.xlu0 %v2288
        %v2339 = vpop.xlane.xlu0 %2338
        %2340 = vadd.xlane.f32.xlu0 %v2289
        %v2341 = vpop.xlane.xlu0 %2340
        %2342 = vadd.xlane.f32.xlu0 %v2290
        %v2343 = vpop.xlane.xlu0 %2342
        %2344 = vadd.xlane.f32.xlu0 %v2291
        %v2345 = vpop.xlane.xlu0 %2344
        %2346 = vadd.xlane.f32.xlu0 %v2292
        %v2347 = vpop.xlane.xlu0 %2346
        %2348 = vadd.xlane.f32.xlu0 %v2293
        %v2349 = vpop.xlane.xlu0 %2348
        %2350 = vadd.xlane.f32.xlu0 %v2294
        %v2351 = vpop.xlane.xlu0 %2350
        %2352 = vadd.xlane.f32.xlu0 %v2295
        %v2353 = vpop.xlane.xlu0 %2352
        %2354 = vadd.xlane.f32.xlu0 %v2296
        %v2355 = vpop.xlane.xlu0 %2354
        %2356 = vadd.xlane.f32.xlu0 %v2297
        %v2357 = vpop.xlane.xlu0 %2356
        %2358 = vadd.xlane.f32.xlu0 %v2298
        %v2359 = vpop.xlane.xlu0 %2358
        %2360 = vadd.xlane.f32.xlu0 %v2299
        %v2361 = vpop.xlane.xlu0 %2360
        %2362 = vadd.xlane.f32.xlu0 %v2300
        %v2363 = vpop.xlane.xlu0 %2362
        %2364 = vadd.xlane.f32.xlu0 %v2301
        %v2365 = vpop.xlane.xlu0 %2364
        %2366 = vst.msk [vmem:[%s315] sm:$0xff] %vm2237, %v2303
        %2367 = vst.msk [vmem:[%s315 + $0x8] sm:$0xff] %vm2237, %v2305
        %2368 = vst.msk [vmem:[%s315 + $0x10] sm:$0xff] %vm2237, %v2307
        %2369 = vst.msk [vmem:[%s315 + $0x18] sm:$0xff] %vm2237, %v2309
        %2370 = vst.msk [vmem:[%s315 + $0x20] sm:$0xff] %vm2237, %v2311
        %2371 = vst.msk [vmem:[%s315 + $0x28] sm:$0xff] %vm2237, %v2313
        %2372 = vst.msk [vmem:[%s315 + $0x30] sm:$0xff] %vm2237, %v2315
        %2373 = vst.msk [vmem:[%s315 + $0x38] sm:$0xff] %vm2237, %v2317
        %2374 = vst.msk [vmem:[%s315 + $0x40] sm:$0xff] %vm2237, %v2319
        %2375 = vst.msk [vmem:[%s315 + $0x48] sm:$0xff] %vm2237, %v2321
        %2376 = vst.msk [vmem:[%s315 + $0x50] sm:$0xff] %vm2237, %v2323
        %2377 = vst.msk [vmem:[%s315 + $0x58] sm:$0xff] %vm2237, %v2325
        %2378 = vst.msk [vmem:[%s315 + $0x60] sm:$0xff] %vm2237, %v2327
        %2379 = vst.msk [vmem:[%s315 + $0x68] sm:$0xff] %vm2237, %v2329
        %2380 = vst.msk [vmem:[%s315 + $0x70] sm:$0xff] %vm2237, %v2331
        %2381 = vst.msk [vmem:[%s315 + $0x78] sm:$0xff] %vm2237, %v2333
        %2382 = vst.msk [vmem:[%s315 + $0x80] sm:$0xff] %vm2237, %v2335
        %2383 = vst.msk [vmem:[%s315 + $0x88] sm:$0xff] %vm2237, %v2337
        %2384 = vst.msk [vmem:[%s315 + $0x90] sm:$0xff] %vm2237, %v2339
        %2385 = vst.msk [vmem:[%s315 + $0x98] sm:$0xff] %vm2237, %v2341
        %2386 = vst.msk [vmem:[%s315 + $0xa0] sm:$0xff] %vm2237, %v2343
        %2387 = vst.msk [vmem:[%s315 + $0xa8] sm:$0xff] %vm2237, %v2345
        %2388 = vst.msk [vmem:[%s315 + $0xb0] sm:$0xff] %vm2237, %v2347
        %2389 = vst.msk [vmem:[%s315 + $0xb8] sm:$0xff] %vm2237, %v2349
        %2390 = vst.msk [vmem:[%s315 + $0xc0] sm:$0xff] %vm2237, %v2351
        %2391 = vst.msk [vmem:[%s315 + $0xc8] sm:$0xff] %vm2237, %v2353
        %2392 = vst.msk [vmem:[%s315 + $0xd0] sm:$0xff] %vm2237, %v2355
        %2393 = vst.msk [vmem:[%s315 + $0xd8] sm:$0xff] %vm2237, %v2357
        %2394 = vst.msk [vmem:[%s315 + $0xe0] sm:$0xff] %vm2237, %v2359
        %2395 = vst.msk [vmem:[%s315 + $0xe8] sm:$0xff] %vm2237, %v2361
        %2396 = vst.msk [vmem:[%s315 + $0xf0] sm:$0xff] %vm2237, %v2363
        %2397 = vst.msk [vmem:[%s315 + $0xf8] sm:$0xff] %vm2237, %v2365
      $region52: #{tpu_custom_call.1} parent=35 // pred_fallthru
        _
      %s2398 = smul.u32 32, %s21
      %p2399 = scmp.lt.s32.totalorder %s2398, 63
      %s2400 = scalar_select %p2399, %s2398, 63
      %s2401 = smul.addr %s2400, 8
      %s2402 = scalar_lea.vmem %s4, %s2401
      %s2403 = smul.u32 32, %s21
      %p2404 = scmp.lt.s32.totalorder %s2403, 63
      %s2405 = scalar_select %p2404, %s2403, 63
      %s2406 = smul.addr %s2405, 8
      %s2407 = scalar_lea.vmem %s5, %s2406
      // Predicated region
      $region53: #{tpu_custom_call.1} parent=35 // pred_check
        %p2408 = pneg %p151
      $region54: #{tpu_custom_call.1} parent=35 // pred_check_branch
        %2410 = sbr.rel (%p2408) target = $region56
      $region55: #{tpu_custom_call.1} parent=35 // pred_region
        %s2411 = smul.u32 32, %s21
      $region56: #{tpu_custom_call.1} parent=35 // pred_fallthru
        _
      // Predicated region
      $region57: #{tpu_custom_call.1} parent=35 // pred_check
        %p2412 = pneg %p177
      $region58: #{tpu_custom_call.1} parent=35 // pred_check_branch
        %2414 = sbr.rel (%p2412) target = $region60
      $region59: #{tpu_custom_call.1} parent=35 // pred_region
        %s2415 = smul.u32 32, %s21
      $region60: #{tpu_custom_call.1} parent=35 // pred_fallthru
        _
    $region36: #{tpu_custom_call.1} parent=5 // pred_fallthru
      _
    %p2416 = scmp.le.s32.totalorder 2, %s12
    // Predicated region
    $region61: #{tpu_custom_call.1} parent=5 // pred_check
      %p2417 = pneg %p2416
    $region62: #{tpu_custom_call.1} parent=5 // pred_check_branch
      %2419 = sbr.rel (%p2417) target = $region64
    $region63: #{tpu_custom_call.1} parent=5 // pred_region
      %s2420 = ssub.s32 %s12, 2
      // Predicated region
      $region65: #{tpu_custom_call.1} parent=63 // pred_check
        %p2421 = pneg %p157
      $region66: #{tpu_custom_call.1} parent=63 // pred_check_branch
        %2423 = sbr.rel (%p2421) target = $region68
      $region67: #{tpu_custom_call.1} parent=63 // pred_region
        %s2424 = smul.u32 32, %s23
        %p2425 = scmp.lt.s32.totalorder %s2424, 63
        %s2426 = scalar_select %p2425, %s2424, 63
        %s2427 = smul.addr %s2426, 8
        %s2428 = scalar_lea.vmem %s4, %s2427
      $region68: #{tpu_custom_call.1} parent=63 // pred_fallthru
        _
      // Predicated region
      $region69: #{tpu_custom_call.1} parent=63 // pred_check
        %p2429 = pneg %p183
      $region70: #{tpu_custom_call.1} parent=63 // pred_check_branch
        %2431 = sbr.rel (%p2429) target = $region72
      $region71: #{tpu_custom_call.1} parent=63 // pred_region
        %s2432 = smul.u32 32, %s23
        %p2433 = scmp.lt.s32.totalorder %s2432, 63
        %s2434 = scalar_select %p2433, %s2432, 63
        %s2435 = smul.addr %s2434, 8
        %s2436 = scalar_lea.vmem %s5, %s2435
      $region72: #{tpu_custom_call.1} parent=63 // pred_fallthru
        _
    $region64: #{tpu_custom_call.1} parent=5 // pred_fallthru
      _
  $region6: #{tpu_custom_call.1} parent=0 // loop_footer
    %s16 = sadd.s32 1, %s12
  $region7: #{tpu_custom_call.1} parent=0 // loop_footer_branch
    %11 = sbr.rel target = $region3
  $region8: #{tpu_custom_call.1} parent=0 // loop_exit
    _

</llo_original>
